<compile_context>
chip_gen: v6e
topology: v6e:2x2x1
jax: 0.10.0
libtpu: 0.0.40
codegen_flags: <defaults>
</compile_context>

<pallas_src>
import numpy as np
import jax
import jax.numpy as jnp
from jax import lax
from jax.experimental import pallas as pl
from jax.experimental.pallas import tpu as pltpu


# ----------------------------------------------------------------------------
# Kernel factory.
# ----------------------------------------------------------------------------
def _make_disblock_kernel(*, Nr, H, lanes_in, lanes_out, downsample, learnable_sc):
    f32, bf16 = jnp.float32, jnp.bfloat16
    M = Nr * H  # matmul M dimension per grid step

    def conv_rows(op_bf16, m_ref):
        """3x3 conv (pad=1 along H) of a (M, K) bf16 slab vs banded weights.

        One dense MXU matmul per kernel row ky; the ky row shift is applied to
        the f32 outputs with zero rows at every image-group boundary."""
        lanes = m_ref.shape[-1]
        z = [jnp.dot(op_bf16, m_ref[ky], preferred_element_type=f32)
             .reshape(Nr, H, lanes) for ky in range(3)]
        zero = jnp.zeros((Nr, 1, lanes), f32)
        out = (z[1]
               + jnp.concatenate([zero, z[0][:, :H - 1, :]], axis=1)   # ky=0: shift down
               + jnp.concatenate([z[2][:, 1:, :], zero], axis=1))      # ky=2: shift up
        return out.reshape(M, lanes)

    def kernel(x_ref, m1_ref, m2_ref, wsc_ref, b1_ref, bo_ref, o_ref):
        xin = x_ref[...].reshape(M, lanes_in)            # raw x (shortcut input)
        xr = jnp.maximum(xin, 0.0).astype(bf16)          # ReLU(x), cast once

        # conv1 (3x3, pad=1) + bias.
        acc1 = conv_rows(xr, m1_ref) + b1_ref[...]

        # ReLU -> bf16 once; conv2 (W half of the avg-pool folded into m2).
        h1 = jnp.maximum(acc1, 0.0).astype(bf16)
        acc2 = conv_rows(h1, m2_ref)

        # Shortcut: 1x1 conv (W-pool folded into wsc) or identity.
        if learnable_sc:
            acc2 = acc2 + jnp.dot(xin.astype(bf16), wsc_ref[...],
                                  preferred_element_type=f32)
        else:
            # Guaranteed Cin == Cout and no downsample (asserted in the wrapper).
            acc2 = acc2 + xin.astype(f32)

        # H half of the 2x2 average pool: even/odd row add (0.25 = full 2x2 factor).
        if downsample:
            pairs = acc2.reshape(M // 2, 2, lanes_out)
            acc2 = (pairs[:, 0, :] + pairs[:, 1, :]) * 0.25

        # conv2 (+shortcut) bias added once, after pooling; lane-dense store.
        o_ref[...] = (acc2 + bo_ref[...]).astype(o_ref.dtype)

    return kernel


# ----------------------------------------------------------------------------
# Wrapper-side weight construction helpers (host numpy, done once).
# ----------------------------------------------------------------------------
def _banded_weight(w_hwio, W):
    """(3,3,CI,CO) conv weight -> (3, W*CI, W*CO) banded matrices.

    m[ky, wi*CI+ci, wo*CO+co] = w[ky, wi-wo+1, ci, co] (zero outside the band),
    i.e. im2col along W folded into the weight so each kernel row is ONE matmul."""
    w_np = np.asarray(w_hwio, np.float32)
    kh, kw, CI, CO = w_np.shape
    m = np.zeros((kh, W * CI, W * CO), np.float32)
    for ky in range(kh):
        for wo in range(W):
            for kx in range(kw):
                wi = wo + kx - (kw // 2)
                if 0 <= wi < W:
                    m[ky, wi * CI:(wi + 1) * CI, wo * CO:(wo + 1) * CO] = w_np[ky, kx]
    return m


def _fold_wpool(m, CO):
    """Fold the W half of the 2x2 avg-pool (factor 1) into the output columns."""
    *lead, ncol = m.shape
    Wdim = ncol // CO
    return m.reshape(*lead, Wdim // 2, 2, CO).sum(axis=-2).reshape(
        *lead, (Wdim // 2) * CO)


def _blockdiag(m, P):
    """kron(I_P, m) over the last two dims (lane packing of P images)."""
    if P == 1:
        return m
    *lead, K, C = m.shape
    out = np.zeros((*lead, P * K, P * C), np.float32)
    for p in range(P):
        out[..., p * K:(p + 1) * K, p * C:(p + 1) * C] = m
    return out


# ----------------------------------------------------------------------------
# Forward wrapper: layout plumbing + pallas_call.
# ----------------------------------------------------------------------------
def disblock_forward(x_nchw, params, *, downsample, learnable_sc):
    N, Cin, H, W = x_nchw.shape
    w1 = params["w1_hwio"]                      # (3,3,Cin,Chid)
    w2 = params["w2_hwio"]                      # (3,3,Chid,Cout)
    Chid, Cout = w1.shape[-1], w2.shape[-1]

    # Module invariants the kernel relies on.
    if downsample:
        assert learnable_sc, "downsample => learnable shortcut (module invariant)"
        assert H % 2 == 0 and W % 2 == 0
    if not learnable_sc:
        assert Cin == Cout and not downsample, "identity shortcut needs Cin==Cout, no pool"

    Ho, Wo = (H // 2, W // 2) if downsample else (H, W)

    # ---- lane packing: P images side-by-side so every last dim >= 128 lanes ----
    lane_min = min(W * Cin, W * Chid, Wo * Cout)
    P = 1
    while P * lane_min < 128 and N % (2 * P) == 0:
        P *= 2
    G = N // P                                  # packed image groups

    # ---- batch folding into the matmul M dim (target M ~ 256, keep grid >= 2) ----
    Nr = 1
    while G % (2 * Nr) == 0 and 2 * Nr * H <= 256:
        Nr *= 2
    if Nr > 1 and G // Nr < 2:
        Nr //= 2                                # keep >=2 grid steps (v7x megacore)

    lanes_in = P * W * Cin
    lanes_hid = P * W * Chid
    lanes_out = P * Wo * Cout
    rows_out = Ho

    # ---- input slab: NCHW -> (G, H, P*W*Cin), channel-minor, p-major lanes ----
    xd = jnp.transpose(x_nchw, (0, 2, 3, 1)).reshape(N, H, W * Cin)
    xd = xd.reshape(G, P, H, W * Cin).transpose(0, 2, 1, 3).reshape(G, H, lanes_in)
    # Pre-cast the only per-step streaming input to bf16 (halves the DMA bytes);
    # keep f32 only when the identity shortcut needs raw-x precision.
    x_in = xd.astype(jnp.bfloat16 if learnable_sc else jnp.float32)

    # ---- weights: banded, W-pool folded, block-diag over P, bf16 MXU operands ----
    m1_np = _blockdiag(_banded_weight(w1, W), P)
    m2_np = _banded_weight(w2, W)
    wsc_np = None
    if learnable_sc:
        wsc_np = np.kron(np.eye(W, dtype=np.float32),
                         np.asarray(params["wsc_io"], np.float32))
    if downsample:
        m2_np = _fold_wpool(m2_np, Cout)
        wsc_np = _fold_wpool(wsc_np, Cout)
    m2_np = _blockdiag(m2_np, P)

    m1 = jnp.asarray(m1_np, jnp.bfloat16)       # (3, P*W*Cin,  P*W*Chid)
    m2 = jnp.asarray(m2_np, jnp.bfloat16)       # (3, P*W*Chid, P*Wo*Cout)

    b1_dense = jnp.asarray(
        np.tile(np.asarray(params["b1"], np.float32), P * W)[None, :])  # (1, lanes_hid)
    bo_np = np.asarray(params["b2"], np.float32)
    if learnable_sc:
        bo_np = bo_np + np.asarray(params["bsc"], np.float32)           # fold sc bias
        wsc = jnp.asarray(_blockdiag(wsc_np, P), jnp.bfloat16)          # (lanes_in, lanes_out)
    else:
        wsc = jnp.zeros((8, 128), jnp.bfloat16)                         # unused dummy
    bo_dense = jnp.asarray(np.tile(bo_np, P * Wo)[None, :])             # (1, lanes_out)

    kernel = _make_disblock_kernel(Nr=Nr, H=H, lanes_in=lanes_in,
                                   lanes_out=lanes_out, downsample=downsample,
                                   learnable_sc=learnable_sc)

    def call(single_buffer_consts):
        # Grid-invariant operands: single-buffer them (double buffering only
        # doubles their VMEM footprint for zero benefit).
        ckw = {"pipeline_mode": pl.Buffered(1)} if single_buffer_consts else {}

        def cspec(shape):
            if len(shape) == 3:
                return pl.BlockSpec(shape, lambda i: (0, 0, 0), **ckw)
            return pl.BlockSpec(shape, lambda i: (0, 0), **ckw)

        return pl.pallas_call(
            kernel,
            out_shape=jax.ShapeDtypeStruct((G * rows_out, lanes_out), x_nchw.dtype),
            grid_spec=pltpu.PrefetchScalarGridSpec(
                num_scalar_prefetch=0,
                grid=(G // Nr,),
                in_specs=[
                    pl.BlockSpec((Nr, H, lanes_in), lambda i: (i, 0, 0)),  # x slab
                    cspec(m1.shape),            # conv1 banded weights
                    cspec(m2.shape),            # conv2 banded weights (W-pool folded)
                    cspec(wsc.shape),           # shortcut weights (or dummy)
                    cspec(b1_dense.shape),      # conv1 bias
                    cspec(bo_dense.shape),      # conv2 + shortcut bias
                ],
                out_specs=pl.BlockSpec((Nr * rows_out, lanes_out), lambda i: (i, 0)),
            ),
            compiler_params=pltpu.CompilerParams(
                dimension_semantics=("parallel",)),     # batch axis -> megacore
        )(x_in, m1, m2, wsc, b1_dense, bo_dense)

    try:
        out2d = jax.block_until_ready(call(True))
    except Exception:
        # Fallback if this jax build rejects pipeline_mode=pl.Buffered(1).
        out2d = jax.block_until_ready(call(False))

    # Lane-dense (G*rows_out, P*Wo*Cout) -> NCHW.
    out = out2d.reshape(G, rows_out, P, Wo, Cout)
    out = jnp.transpose(out, (0, 2, 4, 1, 3)).reshape(N, Cout, rows_out, Wo)
    return out


# ----------------------------------------------------------------------------
# Deterministic parameter setup (synthetic weights) + spectral normalization.
# ----------------------------------------------------------------------------
def _spectral_normalize(w_oihw, u, n_power_iterations=1, eps=1e-12):
    """PyTorch-style spectral norm (one power iteration, deterministic u)."""
    O = w_oihw.shape[0]
    wm = w_oihw.reshape(O, -1)
    u = u / (jnp.linalg.norm(u) + eps)
    v = None
    for _ in range(n_power_iterations):
        v = wm.T @ u
        v = v / (jnp.linalg.norm(v) + eps)
        u = wm @ v
        u = u / (jnp.linalg.norm(u) + eps)
    sigma = u @ (wm @ v)
    return w_oihw / sigma


def _ref_forward(x, p, *, downsample, learnable_sc):
    """Pure-JAX (XLA) reference of DisBlock.forward for a sanity check."""
    def conv(h, w, b, pad):
        y = lax.conv_general_dilated(
            h, w, (1, 1), [(pad, pad), (pad, pad)],
            dimension_numbers=("NCHW", "OIHW", "NCHW"))
        return y + b[None, :, None, None]

    def avgpool(h):
        return lax.reduce_window(h, 0.0, lax.add,
                                 (1, 1, 2, 2), (1, 1, 2, 2), "VALID") / 4.0

    h = jax.nn.relu(x)
    h = conv(h, p["w1_oihw"], p["b1"], 1)
    h = jax.nn.relu(h)
    h = conv(h, p["w2_oihw"], p["b2"], 1)
    if downsample:
        h = avgpool(h)
    if learnable_sc:
        s = conv(x, p["wsc_oihw"], p["bsc"], 0)
        if downsample:
            s = avgpool(s)
    else:
        s = x
    return h + s


if __name__ == "__main__":
    key = jax.random.PRNGKey(0)
    keys = jax.random.split(key, 10)

    # Small shapes consistent with the module (NCHW input, like PyTorch).
    N, Cin, H, W = 2, 4, 16, 16
    Cout = 8
    Chid = Cin                      # hidden_channels defaults to in_channels
    downsample = True
    learnable_sc = (Cin != Cout) or downsample
    d_spectral_norm = True          # args.d_spectral_norm

    # Deterministic synthetic parameters (PyTorch OIHW conv layout).
    w1 = 0.1 * jax.random.normal(keys[0], (Chid, Cin, 3, 3), jnp.float32)
    b1 = 0.1 * jax.random.normal(keys[1], (Chid,), jnp.float32)
    w2 = 0.1 * jax.random.normal(keys[2], (Cout, Chid, 3, 3), jnp.float32)
    b2 = 0.1 * jax.random.normal(keys[3], (Cout,), jnp.float32)
    wsc = 0.1 * jax.random.normal(keys[4], (Cout, Cin, 1, 1), jnp.float32)
    bsc = 0.1 * jax.random.normal(keys[5], (Cout,), jnp.float32)
    x = jax.random.normal(keys[6], (N, Cin, H, W), jnp.float32)

    if d_spectral_norm:
        w1 = _spectral_normalize(w1, jax.random.normal(keys[7], (Chid,)))
        w2 = _spectral_normalize(w2, jax.random.normal(keys[8], (Cout,)))
        wsc = _spectral_normalize(wsc, jax.random.normal(keys[9], (Cout,)))

    params = {
        # kernel-side layouts
        "w1_hwio": jnp.transpose(w1, (2, 3, 1, 0)),
        "w2_hwio": jnp.transpose(w2, (2, 3, 1, 0)),
        "wsc_io": jnp.transpose(wsc[:, :, 0, 0], (1, 0)),
        "b1": b1, "b2": b2, "bsc": bsc,
        # reference-side layouts
        "w1_oihw": w1, "w2_oihw": w2, "wsc_oihw": wsc,
    }

    out = disblock_forward(x, params, downsample=downsample,
                           learnable_sc=learnable_sc)
    out = jax.block_until_ready(out)

    ref = _ref_forward(x, params, downsample=downsample,
                       learnable_sc=learnable_sc)
    ref = jax.block_until_ready(ref)

    assert out.shape == ref.shape, (out.shape, ref.shape)
    # Loose tolerance: bf16 MXU operands (f32 accumulation) vs f32 XLA reference.
    if not np.allclose(np.asarray(out), np.asarray(ref), rtol=5e-2, atol=5e-2):
        max_diff = float(np.max(np.abs(np.asarray(out) - np.asarray(ref))))
        raise AssertionError(f"Pallas DisBlock mismatch, max |diff| = {max_diff}")

    print("KERNEL_OK")
</pallas_src>

<mosaic_0001>
module attributes {stable_mosaic.version = 11 : i64} {
  func.func @kernel(%arg0: i32, %arg1: memref<1x16x128xbf16, #tpu.memory_space<vmem>>, %arg2: memref<3x128x128xbf16, #tpu.memory_space<vmem>>, %arg3: memref<3x128x128xbf16, #tpu.memory_space<vmem>>, %arg4: memref<128x128xbf16, #tpu.memory_space<vmem>>, %arg5: memref<1x128xf32, #tpu.memory_space<vmem>>, %arg6: memref<1x128xf32, #tpu.memory_space<vmem>>, %arg7: memref<8x128xf32, #tpu.memory_space<vmem>>) attributes {dimension_semantics = [#tpu.dimension_semantics<parallel>], iteration_bounds = array<i64: 1>, scalar_prefetch = 0 : i64, scratch_operands = 0 : i64, tpu.core_type = #tpu.core_type<tc>, window_params = [{transform_indices = @transform_0, window_bounds = array<i64: 1, 16, 128>}, {pipeline_mode = #tpu.pipeline_mode<synchronous>, transform_indices = @transform_1, window_bounds = array<i64: 3, 128, 128>}, {pipeline_mode = #tpu.pipeline_mode<synchronous>, transform_indices = @transform_2, window_bounds = array<i64: 3, 128, 128>}, {pipeline_mode = #tpu.pipeline_mode<synchronous>, transform_indices = @transform_3, window_bounds = array<i64: 128, 128>}, {pipeline_mode = #tpu.pipeline_mode<synchronous>, transform_indices = @transform_4, window_bounds = array<i64: 1, 128>}, {pipeline_mode = #tpu.pipeline_mode<synchronous>, transform_indices = @transform_5, window_bounds = array<i64: 1, 128>}, {transform_indices = @transform_6, window_bounds = array<i64: 8, 128>}]} {
    %c0 = arith.constant 0 : index
    %c0_0 = arith.constant 0 : index
    %c0_1 = arith.constant 0 : index
    %0 = vector.load %arg1[%c0, %c0_0, %c0_1] : memref<1x16x128xbf16, #tpu.memory_space<vmem>>, vector<1x16x128xbf16>
    %1 = vector.shape_cast %0 : vector<1x16x128xbf16> to vector<16x128xbf16>
    %cst = arith.constant 0.000000e+00 : bf16
    %2 = vector.broadcast %cst : bf16 to vector<16x128xbf16>
    %3 = arith.maximumf %1, %2 : vector<16x128xbf16>
    %c0_2 = arith.constant 0 : index
    %c0_3 = arith.constant 0 : index
    %c0_4 = arith.constant 0 : index
    %4 = vector.load %arg2[%c0_2, %c0_3, %c0_4] : memref<3x128x128xbf16, #tpu.memory_space<vmem>>, vector<1x128x128xbf16>
    %5 = vector.shape_cast %4 : vector<1x128x128xbf16> to vector<128x128xbf16>
    %cst_5 = arith.constant dense<0.000000e+00> : vector<16x128xf32>
    %6 = tpu.matmul %3, %5, %cst_5 {dimension_numbers = #tpu.dot_dimension_numbers<[1], [0], [0], [1], [0, 0, 1, 1], [], []>} : vector<16x128xbf16>, vector<128x128xbf16>, vector<16x128xf32> -> vector<16x128xf32>
    %7 = vector.shape_cast %6 : vector<16x128xf32> to vector<1x16x128xf32>
    %c1 = arith.constant 1 : index
    %c0_6 = arith.constant 0 : index
    %c0_7 = arith.constant 0 : index
    %8 = vector.load %arg2[%c1, %c0_6, %c0_7] : memref<3x128x128xbf16, #tpu.memory_space<vmem>>, vector<1x128x128xbf16>
    %9 = vector.shape_cast %8 : vector<1x128x128xbf16> to vector<128x128xbf16>
    %cst_8 = arith.constant dense<0.000000e+00> : vector<16x128xf32>
    %10 = tpu.matmul %3, %9, %cst_8 {dimension_numbers = #tpu.dot_dimension_numbers<[1], [0], [0], [1], [0, 0, 1, 1], [], []>} : vector<16x128xbf16>, vector<128x128xbf16>, vector<16x128xf32> -> vector<16x128xf32>
    %11 = vector.shape_cast %10 : vector<16x128xf32> to vector<1x16x128xf32>
    %c2 = arith.constant 2 : index
    %c0_9 = arith.constant 0 : index
    %c0_10 = arith.constant 0 : index
    %12 = vector.load %arg2[%c2, %c0_9, %c0_10] : memref<3x128x128xbf16, #tpu.memory_space<vmem>>, vector<1x128x128xbf16>
    %13 = vector.shape_cast %12 : vector<1x128x128xbf16> to vector<128x128xbf16>
    %cst_11 = arith.constant dense<0.000000e+00> : vector<16x128xf32>
    %14 = tpu.matmul %3, %13, %cst_11 {dimension_numbers = #tpu.dot_dimension_numbers<[1], [0], [0], [1], [0, 0, 1, 1], [], []>} : vector<16x128xbf16>, vector<128x128xbf16>, vector<16x128xf32> -> vector<16x128xf32>
    %15 = vector.shape_cast %14 : vector<16x128xf32> to vector<1x16x128xf32>
    %cst_12 = arith.constant 0.000000e+00 : f32
    %16 = vector.broadcast %cst_12 : f32 to vector<1x1x128xf32>
    %17 = vector.extract_strided_slice %7 {offsets = [0, 0, 0], sizes = [1, 15, 128], strides = [1, 1, 1]} : vector<1x16x128xf32> to vector<1x15x128xf32>
    %18 = tpu.concatenate %16, %17 in 1 : vector<1x1x128xf32>, vector<1x15x128xf32> -> vector<1x16x128xf32>
    %19 = arith.addf %11, %18 : vector<1x16x128xf32>
    %20 = vector.extract_strided_slice %15 {offsets = [0, 1, 0], sizes = [1, 15, 128], strides = [1, 1, 1]} : vector<1x16x128xf32> to vector<1x15x128xf32>
    %21 = tpu.concatenate %20, %16 in 1 : vector<1x15x128xf32>, vector<1x1x128xf32> -> vector<1x16x128xf32>
    %22 = arith.addf %19, %21 : vector<1x16x128xf32>
    %23 = vector.shape_cast %22 : vector<1x16x128xf32> to vector<16x128xf32>
    %c0_13 = arith.constant 0 : index
    %c0_14 = arith.constant 0 : index
    %24 = vector.load %arg5[%c0_13, %c0_14] : memref<1x128xf32, #tpu.memory_space<vmem>>, vector<1x128xf32>
    %25 = vector.broadcast %24 : vector<1x128xf32> to vector<16x128xf32>
    %26 = arith.addf %23, %25 : vector<16x128xf32>
    %cst_15 = arith.constant 0.000000e+00 : f32
    %27 = vector.broadcast %cst_15 : f32 to vector<16x128xf32>
    %28 = arith.maximumf %26, %27 : vector<16x128xf32>
    %29 = arith.truncf %28 : vector<16x128xf32> to vector<16x128xbf16>
    %c0_16 = arith.constant 0 : index
    %c0_17 = arith.constant 0 : index
    %c0_18 = arith.constant 0 : index
    %30 = vector.load %arg3[%c0_16, %c0_17, %c0_18] : memref<3x128x128xbf16, #tpu.memory_space<vmem>>, vector<1x128x128xbf16>
    %31 = vector.shape_cast %30 : vector<1x128x128xbf16> to vector<128x128xbf16>
    %cst_19 = arith.constant dense<0.000000e+00> : vector<16x128xf32>
    %32 = tpu.matmul %29, %31, %cst_19 {dimension_numbers = #tpu.dot_dimension_numbers<[1], [0], [0], [1], [0, 0, 1, 1], [], []>} : vector<16x128xbf16>, vector<128x128xbf16>, vector<16x128xf32> -> vector<16x128xf32>
    %33 = vector.shape_cast %32 : vector<16x128xf32> to vector<1x16x128xf32>
    %c1_20 = arith.constant 1 : index
    %c0_21 = arith.constant 0 : index
    %c0_22 = arith.constant 0 : index
    %34 = vector.load %arg3[%c1_20, %c0_21, %c0_22] : memref<3x128x128xbf16, #tpu.memory_space<vmem>>, vector<1x128x128xbf16>
    %35 = vector.shape_cast %34 : vector<1x128x128xbf16> to vector<128x128xbf16>
    %cst_23 = arith.constant dense<0.000000e+00> : vector<16x128xf32>
    %36 = tpu.matmul %29, %35, %cst_23 {dimension_numbers = #tpu.dot_dimension_numbers<[1], [0], [0], [1], [0, 0, 1, 1], [], []>} : vector<16x128xbf16>, vector<128x128xbf16>, vector<16x128xf32> -> vector<16x128xf32>
    %37 = vector.shape_cast %36 : vector<16x128xf32> to vector<1x16x128xf32>
    %c2_24 = arith.constant 2 : index
    %c0_25 = arith.constant 0 : index
    %c0_26 = arith.constant 0 : index
    %38 = vector.load %arg3[%c2_24, %c0_25, %c0_26] : memref<3x128x128xbf16, #tpu.memory_space<vmem>>, vector<1x128x128xbf16>
    %39 = vector.shape_cast %38 : vector<1x128x128xbf16> to vector<128x128xbf16>
    %cst_27 = arith.constant dense<0.000000e+00> : vector<16x128xf32>
    %40 = tpu.matmul %29, %39, %cst_27 {dimension_numbers = #tpu.dot_dimension_numbers<[1], [0], [0], [1], [0, 0, 1, 1], [], []>} : vector<16x128xbf16>, vector<128x128xbf16>, vector<16x128xf32> -> vector<16x128xf32>
    %41 = vector.shape_cast %40 : vector<16x128xf32> to vector<1x16x128xf32>
    %cst_28 = arith.constant 0.000000e+00 : f32
    %42 = vector.broadcast %cst_28 : f32 to vector<1x1x128xf32>
    %43 = vector.extract_strided_slice %33 {offsets = [0, 0, 0], sizes = [1, 15, 128], strides = [1, 1, 1]} : vector<1x16x128xf32> to vector<1x15x128xf32>
    %44 = tpu.concatenate %42, %43 in 1 : vector<1x1x128xf32>, vector<1x15x128xf32> -> vector<1x16x128xf32>
    %45 = arith.addf %37, %44 : vector<1x16x128xf32>
    %46 = vector.extract_strided_slice %41 {offsets = [0, 1, 0], sizes = [1, 15, 128], strides = [1, 1, 1]} : vector<1x16x128xf32> to vector<1x15x128xf32>
    %47 = tpu.concatenate %46, %42 in 1 : vector<1x15x128xf32>, vector<1x1x128xf32> -> vector<1x16x128xf32>
    %48 = arith.addf %45, %47 : vector<1x16x128xf32>
    %49 = vector.shape_cast %48 : vector<1x16x128xf32> to vector<16x128xf32>
    %c0_29 = arith.constant 0 : index
    %c0_30 = arith.constant 0 : index
    %50 = vector.load %arg4[%c0_29, %c0_30] : memref<128x128xbf16, #tpu.memory_space<vmem>>, vector<128x128xbf16>
    %cst_31 = arith.constant dense<0.000000e+00> : vector<16x128xf32>
    %51 = tpu.matmul %1, %50, %cst_31 {dimension_numbers = #tpu.dot_dimension_numbers<[1], [0], [0], [1], [0, 0, 1, 1], [], []>} : vector<16x128xbf16>, vector<128x128xbf16>, vector<16x128xf32> -> vector<16x128xf32>
    %52 = arith.addf %49, %51 : vector<16x128xf32>
    %53 = vector.shape_cast %52 : vector<16x128xf32> to vector<8x2x128xf32>
    %54 = vector.extract_strided_slice %53 {offsets = [0, 0, 0], sizes = [8, 1, 128], strides = [1, 1, 1]} : vector<8x2x128xf32> to vector<8x1x128xf32>
    %55 = vector.shape_cast %54 : vector<8x1x128xf32> to vector<8x128xf32>
    %56 = vector.extract_strided_slice %53 {offsets = [0, 1, 0], sizes = [8, 1, 128], strides = [1, 1, 1]} : vector<8x2x128xf32> to vector<8x1x128xf32>
    %57 = vector.shape_cast %56 : vector<8x1x128xf32> to vector<8x128xf32>
    %58 = arith.addf %55, %57 : vector<8x128xf32>
    %cst_32 = arith.constant 2.500000e-01 : f32
    %59 = vector.broadcast %cst_32 : f32 to vector<8x128xf32>
    %60 = arith.mulf %58, %59 : vector<8x128xf32>
    %c0_33 = arith.constant 0 : index
    %c0_34 = arith.constant 0 : index
    %61 = vector.load %arg6[%c0_33, %c0_34] : memref<1x128xf32, #tpu.memory_space<vmem>>, vector<1x128xf32>
    %62 = vector.broadcast %61 : vector<1x128xf32> to vector<8x128xf32>
    %63 = arith.addf %60, %62 : vector<8x128xf32>
    %c0_35 = arith.constant 0 : index
    %c0_36 = arith.constant 0 : index
    %64 = vector.load %arg7[%c0_35, %c0_36] : memref<8x128xf32, #tpu.memory_space<vmem>>, vector<8x128xf32>
    tpu.vector_store %arg7[%c0_35, %c0_36], %63 {strides = array<i32>} : memref<8x128xf32, #tpu.memory_space<vmem>>, vector<8x128xf32>,
    return
  }
  func.func @transform_0(%arg0: i32) -> (i32, i32, i32) {
    %c0_i32 = arith.constant 0 : i32
    %c0_i32_0 = arith.constant 0 : i32
    %c0_i32_1 = arith.constant 0 : i32
    return %arg0, %c0_i32, %c0_i32_0 : i32, i32, i32
  }
  func.func @transform_1(%arg0: i32) -> (i32, i32, i32) {
    %c0_i32 = arith.constant 0 : i32
    %c0_i32_0 = arith.constant 0 : i32
    %c0_i32_1 = arith.constant 0 : i32
    %c0_i32_2 = arith.constant 0 : i32
    return %c0_i32, %c0_i32_0, %c0_i32_1 : i32, i32, i32
  }
  func.func @transform_2(%arg0: i32) -> (i32, i32, i32) {
    %c0_i32 = arith.constant 0 : i32
    %c0_i32_0 = arith.constant 0 : i32
    %c0_i32_1 = arith.constant 0 : i32
    %c0_i32_2 = arith.constant 0 : i32
    return %c0_i32, %c0_i32_0, %c0_i32_1 : i32, i32, i32
  }
  func.func @transform_3(%arg0: i32) -> (i32, i32) {
    %c0_i32 = arith.constant 0 : i32
    %c0_i32_0 = arith.constant 0 : i32
    %c0_i32_1 = arith.constant 0 : i32
    return %c0_i32, %c0_i32_0 : i32, i32
  }
  func.func @transform_4(%arg0: i32) -> (i32, i32) {
    %c0_i32 = arith.constant 0 : i32
    %c0_i32_0 = arith.constant 0 : i32
    %c0_i32_1 = arith.constant 0 : i32
    return %c0_i32, %c0_i32_0 : i32, i32
  }
  func.func @transform_5(%arg0: i32) -> (i32, i32) {
    %c0_i32 = arith.constant 0 : i32
    %c0_i32_0 = arith.constant 0 : i32
    %c0_i32_1 = arith.constant 0 : i32
    return %c0_i32, %c0_i32_0 : i32, i32
  }
  func.func @transform_6(%arg0: i32) -> (i32, i32) {
    %c0_i32 = arith.constant 0 : i32
    %c0_i32_0 = arith.constant 0 : i32
    return %arg0, %c0_i32 : i32, i32
  }
}

module attributes {stable_mosaic.version = 11 : i64} {
  func.func @kernel(%arg0: i32, %arg1: memref<1x16x128xbf16, #tpu.memory_space<vmem>>, %arg2: memref<3x128x128xbf16, #tpu.memory_space<vmem>>, %arg3: memref<3x128x128xbf16, #tpu.memory_space<vmem>>, %arg4: memref<128x128xbf16, #tpu.memory_space<vmem>>, %arg5: memref<1x128xf32, #tpu.memory_space<vmem>>, %arg6: memref<1x128xf32, #tpu.memory_space<vmem>>, %arg7: memref<8x128xf32, #tpu.memory_space<vmem>>) attributes {dimension_semantics = [#tpu.dimension_semantics<parallel>], iteration_bounds = array<i64: 1>, scalar_prefetch = 0 : i64, scratch_operands = 0 : i64, tpu.core_type = #tpu.core_type<tc>, window_params = [{transform_indices = @transform_0, window_bounds = array<i64: 1, 16, 128>}, {pipeline_mode = #tpu.pipeline_mode<synchronous>, transform_indices = @transform_1, window_bounds = array<i64: 3, 128, 128>}, {pipeline_mode = #tpu.pipeline_mode<synchronous>, transform_indices = @transform_2, window_bounds = array<i64: 3, 128, 128>}, {pipeline_mode = #tpu.pipeline_mode<synchronous>, transform_indices = @transform_3, window_bounds = array<i64: 128, 128>}, {pipeline_mode = #tpu.pipeline_mode<synchronous>, transform_indices = @transform_4, window_bounds = array<i64: 1, 128>}, {pipeline_mode = #tpu.pipeline_mode<synchronous>, transform_indices = @transform_5, window_bounds = array<i64: 1, 128>}, {transform_indices = @transform_6, window_bounds = array<i64: 8, 128>}]} {
    %c0 = arith.constant 0 : index
    %c0_0 = arith.constant 0 : index
    %c0_1 = arith.constant 0 : index
    %0 = vector.load %arg1[%c0, %c0_0, %c0_1] : memref<1x16x128xbf16, #tpu.memory_space<vmem>>, vector<1x16x128xbf16>
    %1 = vector.shape_cast %0 : vector<1x16x128xbf16> to vector<16x128xbf16>
    %cst = arith.constant 0.000000e+00 : bf16
    %2 = vector.broadcast %cst : bf16 to vector<16x128xbf16>
    %3 = arith.maximumf %1, %2 : vector<16x128xbf16>
    %c0_2 = arith.constant 0 : index
    %c0_3 = arith.constant 0 : index
    %c0_4 = arith.constant 0 : index
    %4 = vector.load %arg2[%c0_2, %c0_3, %c0_4] : memref<3x128x128xbf16, #tpu.memory_space<vmem>>, vector<1x128x128xbf16>
    %5 = vector.shape_cast %4 : vector<1x128x128xbf16> to vector<128x128xbf16>
    %cst_5 = arith.constant dense<0.000000e+00> : vector<16x128xf32>
    %6 = tpu.matmul %3, %5, %cst_5 {dimension_numbers = #tpu.dot_dimension_numbers<[1], [0], [0], [1], [0, 0, 1, 1], [], []>} : vector<16x128xbf16>, vector<128x128xbf16>, vector<16x128xf32> -> vector<16x128xf32>
    %7 = vector.shape_cast %6 : vector<16x128xf32> to vector<1x16x128xf32>
    %c1 = arith.constant 1 : index
    %c0_6 = arith.constant 0 : index
    %c0_7 = arith.constant 0 : index
    %8 = vector.load %arg2[%c1, %c0_6, %c0_7] : memref<3x128x128xbf16, #tpu.memory_space<vmem>>, vector<1x128x128xbf16>
    %9 = vector.shape_cast %8 : vector<1x128x128xbf16> to vector<128x128xbf16>
    %cst_8 = arith.constant dense<0.000000e+00> : vector<16x128xf32>
    %10 = tpu.matmul %3, %9, %cst_8 {dimension_numbers = #tpu.dot_dimension_numbers<[1], [0], [0], [1], [0, 0, 1, 1], [], []>} : vector<16x128xbf16>, vector<128x128xbf16>, vector<16x128xf32> -> vector<16x128xf32>
    %11 = vector.shape_cast %10 : vector<16x128xf32> to vector<1x16x128xf32>
    %c2 = arith.constant 2 : index
    %c0_9 = arith.constant 0 : index
    %c0_10 = arith.constant 0 : index
    %12 = vector.load %arg2[%c2, %c0_9, %c0_10] : memref<3x128x128xbf16, #tpu.memory_space<vmem>>, vector<1x128x128xbf16>
    %13 = vector.shape_cast %12 : vector<1x128x128xbf16> to vector<128x128xbf16>
    %cst_11 = arith.constant dense<0.000000e+00> : vector<16x128xf32>
    %14 = tpu.matmul %3, %13, %cst_11 {dimension_numbers = #tpu.dot_dimension_numbers<[1], [0], [0], [1], [0, 0, 1, 1], [], []>} : vector<16x128xbf16>, vector<128x128xbf16>, vector<16x128xf32> -> vector<16x128xf32>
    %15 = vector.shape_cast %14 : vector<16x128xf32> to vector<1x16x128xf32>
    %cst_12 = arith.constant 0.000000e+00 : f32
    %16 = vector.broadcast %cst_12 : f32 to vector<1x1x128xf32>
    %17 = vector.extract_strided_slice %7 {offsets = [0, 0, 0], sizes = [1, 15, 128], strides = [1, 1, 1]} : vector<1x16x128xf32> to vector<1x15x128xf32>
    %18 = tpu.concatenate %16, %17 in 1 : vector<1x1x128xf32>, vector<1x15x128xf32> -> vector<1x16x128xf32>
    %19 = arith.addf %11, %18 : vector<1x16x128xf32>
    %20 = vector.extract_strided_slice %15 {offsets = [0, 1, 0], sizes = [1, 15, 128], strides = [1, 1, 1]} : vector<1x16x128xf32> to vector<1x15x128xf32>
    %21 = tpu.concatenate %20, %16 in 1 : vector<1x15x128xf32>, vector<1x1x128xf32> -> vector<1x16x128xf32>
    %22 = arith.addf %19, %21 : vector<1x16x128xf32>
    %23 = vector.shape_cast %22 : vector<1x16x128xf32> to vector<16x128xf32>
    %c0_13 = arith.constant 0 : index
    %c0_14 = arith.constant 0 : index
    %24 = vector.load %arg5[%c0_13, %c0_14] : memref<1x128xf32, #tpu.memory_space<vmem>>, vector<1x128xf32>
    %25 = vector.broadcast %24 : vector<1x128xf32> to vector<16x128xf32>
    %26 = arith.addf %23, %25 : vector<16x128xf32>
    %cst_15 = arith.constant 0.000000e+00 : f32
    %27 = vector.broadcast %cst_15 : f32 to vector<16x128xf32>
    %28 = arith.maximumf %26, %27 : vector<16x128xf32>
    %29 = arith.truncf %28 : vector<16x128xf32> to vector<16x128xbf16>
    %c0_16 = arith.constant 0 : index
    %c0_17 = arith.constant 0 : index
    %c0_18 = arith.constant 0 : index
    %30 = vector.load %arg3[%c0_16, %c0_17, %c0_18] : memref<3x128x128xbf16, #tpu.memory_space<vmem>>, vector<1x128x128xbf16>
    %31 = vector.shape_cast %30 : vector<1x128x128xbf16> to vector<128x128xbf16>
    %cst_19 = arith.constant dense<0.000000e+00> : vector<16x128xf32>
    %32 = tpu.matmul %29, %31, %cst_19 {dimension_numbers = #tpu.dot_dimension_numbers<[1], [0], [0], [1], [0, 0, 1, 1], [], []>} : vector<16x128xbf16>, vector<128x128xbf16>, vector<16x128xf32> -> vector<16x128xf32>
    %33 = vector.shape_cast %32 : vector<16x128xf32> to vector<1x16x128xf32>
    %c1_20 = arith.constant 1 : index
    %c0_21 = arith.constant 0 : index
    %c0_22 = arith.constant 0 : index
    %34 = vector.load %arg3[%c1_20, %c0_21, %c0_22] : memref<3x128x128xbf16, #tpu.memory_space<vmem>>, vector<1x128x128xbf16>
    %35 = vector.shape_cast %34 : vector<1x128x128xbf16> to vector<128x128xbf16>
    %cst_23 = arith.constant dense<0.000000e+00> : vector<16x128xf32>
    %36 = tpu.matmul %29, %35, %cst_23 {dimension_numbers = #tpu.dot_dimension_numbers<[1], [0], [0], [1], [0, 0, 1, 1], [], []>} : vector<16x128xbf16>, vector<128x128xbf16>, vector<16x128xf32> -> vector<16x128xf32>
    %37 = vector.shape_cast %36 : vector<16x128xf32> to vector<1x16x128xf32>
    %c2_24 = arith.constant 2 : index
    %c0_25 = arith.constant 0 : index
    %c0_26 = arith.constant 0 : index
    %38 = vector.load %arg3[%c2_24, %c0_25, %c0_26] : memref<3x128x128xbf16, #tpu.memory_space<vmem>>, vector<1x128x128xbf16>
    %39 = vector.shape_cast %38 : vector<1x128x128xbf16> to vector<128x128xbf16>
    %cst_27 = arith.constant dense<0.000000e+00> : vector<16x128xf32>
    %40 = tpu.matmul %29, %39, %cst_27 {dimension_numbers = #tpu.dot_dimension_numbers<[1], [0], [0], [1], [0, 0, 1, 1], [], []>} : vector<16x128xbf16>, vector<128x128xbf16>, vector<16x128xf32> -> vector<16x128xf32>
    %41 = vector.shape_cast %40 : vector<16x128xf32> to vector<1x16x128xf32>
    %cst_28 = arith.constant 0.000000e+00 : f32
    %42 = vector.broadcast %cst_28 : f32 to vector<1x1x128xf32>
    %43 = vector.extract_strided_slice %33 {offsets = [0, 0, 0], sizes = [1, 15, 128], strides = [1, 1, 1]} : vector<1x16x128xf32> to vector<1x15x128xf32>
    %44 = tpu.concatenate %42, %43 in 1 : vector<1x1x128xf32>, vector<1x15x128xf32> -> vector<1x16x128xf32>
    %45 = arith.addf %37, %44 : vector<1x16x128xf32>
    %46 = vector.extract_strided_slice %41 {offsets = [0, 1, 0], sizes = [1, 15, 128], strides = [1, 1, 1]} : vector<1x16x128xf32> to vector<1x15x128xf32>
    %47 = tpu.concatenate %46, %42 in 1 : vector<1x15x128xf32>, vector<1x1x128xf32> -> vector<1x16x128xf32>
    %48 = arith.addf %45, %47 : vector<1x16x128xf32>
    %49 = vector.shape_cast %48 : vector<1x16x128xf32> to vector<16x128xf32>
    %c0_29 = arith.constant 0 : index
    %c0_30 = arith.constant 0 : index
    %50 = vector.load %arg4[%c0_29, %c0_30] : memref<128x128xbf16, #tpu.memory_space<vmem>>, vector<128x128xbf16>
    %cst_31 = arith.constant dense<0.000000e+00> : vector<16x128xf32>
    %51 = tpu.matmul %1, %50, %cst_31 {dimension_numbers = #tpu.dot_dimension_numbers<[1], [0], [0], [1], [0, 0, 1, 1], [], []>} : vector<16x128xbf16>, vector<128x128xbf16>, vector<16x128xf32> -> vector<16x128xf32>
    %52 = arith.addf %49, %51 : vector<16x128xf32>
    %53 = vector.shape_cast %52 : vector<16x128xf32> to vector<8x2x128xf32>
    %54 = vector.extract_strided_slice %53 {offsets = [0, 0, 0], sizes = [8, 1, 128], strides = [1, 1, 1]} : vector<8x2x128xf32> to vector<8x1x128xf32>
    %55 = vector.shape_cast %54 : vector<8x1x128xf32> to vector<8x128xf32>
    %56 = vector.extract_strided_slice %53 {offsets = [0, 1, 0], sizes = [8, 1, 128], strides = [1, 1, 1]} : vector<8x2x128xf32> to vector<8x1x128xf32>
    %57 = vector.shape_cast %56 : vector<8x1x128xf32> to vector<8x128xf32>
    %58 = arith.addf %55, %57 : vector<8x128xf32>
    %cst_32 = arith.constant 2.500000e-01 : f32
    %59 = vector.broadcast %cst_32 : f32 to vector<8x128xf32>
    %60 = arith.mulf %58, %59 : vector<8x128xf32>
    %c0_33 = arith.constant 0 : index
    %c0_34 = arith.constant 0 : index
    %61 = vector.load %arg6[%c0_33, %c0_34] : memref<1x128xf32, #tpu.memory_space<vmem>>, vector<1x128xf32>
    %62 = vector.broadcast %61 : vector<1x128xf32> to vector<8x128xf32>
    %63 = arith.addf %60, %62 : vector<8x128xf32>
    %c0_35 = arith.constant 0 : index
    %c0_36 = arith.constant 0 : index
    %64 = vector.load %arg7[%c0_35, %c0_36] : memref<8x128xf32, #tpu.memory_space<vmem>>, vector<8x128xf32>
    tpu.vector_store %arg7[%c0_35, %c0_36], %63 {strides = array<i32>} : memref<8x128xf32, #tpu.memory_space<vmem>>, vector<8x128xf32>,
    return
  }
  func.func @transform_0(%arg0: i32) -> (i32, i32, i32) {
    %c0_i32 = arith.constant 0 : i32
    %c0_i32_0 = arith.constant 0 : i32
    %c0_i32_1 = arith.constant 0 : i32
    return %arg0, %c0_i32, %c0_i32_0 : i32, i32, i32
  }
  func.func @transform_1(%arg0: i32) -> (i32, i32, i32) {
    %c0_i32 = arith.constant 0 : i32
    %c0_i32_0 = arith.constant 0 : i32
    %c0_i32_1 = arith.constant 0 : i32
    %c0_i32_2 = arith.constant 0 : i32
    return %c0_i32, %c0_i32_0, %c0_i32_1 : i32, i32, i32
  }
  func.func @transform_2(%arg0: i32) -> (i32, i32, i32) {
    %c0_i32 = arith.constant 0 : i32
    %c0_i32_0 = arith.constant 0 : i32
    %c0_i32_1 = arith.constant 0 : i32
    %c0_i32_2 = arith.constant 0 : i32
    return %c0_i32, %c0_i32_0, %c0_i32_1 : i32, i32, i32
  }
  func.func @transform_3(%arg0: i32) -> (i32, i32) {
    %c0_i32 = arith.constant 0 : i32
    %c0_i32_0 = arith.constant 0 : i32
    %c0_i32_1 = arith.constant 0 : i32
    return %c0_i32, %c0_i32_0 : i32, i32
  }
  func.func @transform_4(%arg0: i32) -> (i32, i32) {
    %c0_i32 = arith.constant 0 : i32
    %c0_i32_0 = arith.constant 0 : i32
    %c0_i32_1 = arith.constant 0 : i32
    return %c0_i32, %c0_i32_0 : i32, i32
  }
  func.func @transform_5(%arg0: i32) -> (i32, i32) {
    %c0_i32 = arith.constant 0 : i32
    %c0_i32_0 = arith.constant 0 : i32
    %c0_i32_1 = arith.constant 0 : i32
    return %c0_i32, %c0_i32_0 : i32, i32
  }
  func.func @transform_6(%arg0: i32) -> (i32, i32) {
    %c0_i32 = arith.constant 0 : i32
    %c0_i32_0 = arith.constant 0 : i32
    return %arg0, %c0_i32 : i32, i32
  }
}

</mosaic_0001>

<llo_original>
// kernel: tpu_custom_call.1
$region0: #{tpu_custom_call.1}
  #allocation0 [shape = 'u32[]', space=smem, size = 0x4, offset = 0x4, fixed_abs, tag = 'smem constant byte address 0x4 - core index']
  #allocation1 [shape = 'u32[144,128]{1,0:T(1,128)}', space=vmem, size = 0x12000, scoped, tag = 'internal scratch']
  %s0 = inlined_call_operand.hbm [shape: bf16[1,16,128], index: 0, kind: input, shape index: {}]
  %s1 = inlined_call_operand.hbm [shape: bf16[3,128,128], index: 1, kind: input, shape index: {}]
  %s2 = inlined_call_operand.hbm [shape: bf16[3,128,128], index: 2, kind: input, shape index: {}]
  %s3 = inlined_call_operand.hbm [shape: bf16[128,128], index: 3, kind: input, shape index: {}]
  %s4 = inlined_call_operand.vmem [shape: f32[1,128], index: 4, kind: input, shape index: {}]
  %s5 = inlined_call_operand.vmem [shape: f32[1,128], index: 5, kind: input, shape index: {}]
  %s6 = inlined_call_operand.hbm [shape: f32[8,128], index: 6, kind: output, shape index: {}]
  %s7 = sld [smem:[#allocation0]]
  $region50: #{tpu_custom_call.1} parent=0
    _
  %s9 = ssub.s32 1, %s7
  %s10 = scalar_select 0, %s9, %s7
  $region1: #{tpu_custom_call.1} parent=0
    #allocation2 [shape = 'u8[4096]{0}', space=vmem, size = 0x1000, scoped, tag = 'input window, operand 0, single buffered']
    #allocation3 [shape = 's32[1]{0}', space=sflag, size = 0x4, scoped, tag = 'scoped memory for tpu_custom_call.1']
    #allocation4 [shape = 's32[1]{0}', space=sflag, size = 0x4, scoped, tag = 'scoped memory for tpu_custom_call.1']
    #allocation5 [shape = 'u8[98304]{0}', space=vmem, size = 0x18000, scoped, tag = 'input window, operand 1, single buffered']
    #allocation6 [shape = 's32[1]{0}', space=sflag, size = 0x4, scoped, tag = 'scoped memory for tpu_custom_call.1']
    #allocation7 [shape = 'u8[98304]{0}', space=vmem, size = 0x18000, scoped, tag = 'input window, operand 2, single buffered']
    #allocation8 [shape = 'u8[32768]{0}', space=vmem, size = 0x8000, scoped, tag = 'input window, operand 3, single buffered']
    #allocation9 [shape = 's32[1]{0}', space=sflag, size = 0x4, scoped, tag = 'scoped memory for tpu_custom_call.1']
    #allocation10 [shape = 'u8[4096]{0}', space=vmem, size = 0x1000, scoped, tag = 'output window, operand 0, single buffered']
    %11 = vsyncpa [#allocation3], 0
    %12 = vsyncpa [#allocation6], 0
    %13 = vsyncpa [#allocation9], 0
    %14 = vsyncpa [#allocation4], 0
    // Predicated region
    $region2: #{tpu_custom_call.1} parent=1 // pred_check
      _
    $region3: #{tpu_custom_call.1} parent=1 // pred_check_branch
      %16 = sbr.rel (0) target = $region5
    $region4: #{tpu_custom_call.1} parent=1 // pred_region
      %s18 = ssub.s32 128, 128
      %19 = vsyncadd [#allocation3], %s18
      %s20 = sshll.u32 [#allocation2], 4
      %s21 = int_to_ptr.vmem [resolvable:$true] %s20
      %26 = dma.hbm_to_vmem [thread:$0]  %s0, 128, %s21, [#allocation3], 64, 64, 4
    $region5: #{tpu_custom_call.1} parent=1 // pred_fallthru
      _
    // Predicated region
    $region6: #{tpu_custom_call.1} parent=1 // pred_check
      _
    $region7: #{tpu_custom_call.1} parent=1 // pred_check_branch
      %28 = sbr.rel (0) target = $region9
    $region8: #{tpu_custom_call.1} parent=1 // pred_region
      %s30 = ssub.s32 3072, 3072
      %31 = vsyncadd [#allocation6], %s30
      %s32 = sshll.u32 [#allocation5], 4
      %s33 = int_to_ptr.vmem [resolvable:$true] %s32
      %38 = dma.hbm_to_vmem [thread:$0]  %s1, 3072, %s33, [#allocation6], 64, 64, 4
    $region9: #{tpu_custom_call.1} parent=1 // pred_fallthru
      _
    // Predicated region
    $region10: #{tpu_custom_call.1} parent=1 // pred_check
      _
    $region11: #{tpu_custom_call.1} parent=1 // pred_check_branch
      %40 = sbr.rel (0) target = $region13
    $region12: #{tpu_custom_call.1} parent=1 // pred_region
      %s42 = ssub.s32 3072, 3072
      %43 = vsyncadd [#allocation6], %s42
      %s44 = sshll.u32 [#allocation7], 4
      %s45 = int_to_ptr.vmem [resolvable:$true] %s44
      %50 = dma.hbm_to_vmem [thread:$0]  %s2, 3072, %s45, [#allocation6], 64, 64, 4
    $region13: #{tpu_custom_call.1} parent=1 // pred_fallthru
      _
    // Predicated region
    $region14: #{tpu_custom_call.1} parent=1 // pred_check
      _
    $region15: #{tpu_custom_call.1} parent=1 // pred_check_branch
      %52 = sbr.rel (0) target = $region17
    $region16: #{tpu_custom_call.1} parent=1 // pred_region
      %s54 = ssub.s32 1024, 1024
      %55 = vsyncadd [#allocation9], %s54
      %s56 = sshll.u32 [#allocation8], 4
      %s57 = int_to_ptr.vmem [resolvable:$true] %s56
      %62 = dma.hbm_to_vmem [thread:$0]  %s3, 1024, %s57, [#allocation9], 64, 64, 4
    $region17: #{tpu_custom_call.1} parent=1 // pred_fallthru
      _
    // Predicated region
    $region18: #{tpu_custom_call.1} parent=1 // pred_check
      _
    $region19: #{tpu_custom_call.1} parent=1 // pred_check_branch
      %64 = sbr.rel (0) target = $region21
    $region20: #{tpu_custom_call.1} parent=1 // pred_region
      _
    $region21: #{tpu_custom_call.1} parent=1 // pred_fallthru
      _
    // Predicated region
    $region22: #{tpu_custom_call.1} parent=1 // pred_check
      _
    $region23: #{tpu_custom_call.1} parent=1 // pred_check_branch
      %66 = sbr.rel (0) target = $region25
    $region24: #{tpu_custom_call.1} parent=1 // pred_region
      _
    $region25: #{tpu_custom_call.1} parent=1 // pred_fallthru
      _
    // Predicated region
    $region26: #{tpu_custom_call.1} parent=1 // pred_check
      _
    $region27: #{tpu_custom_call.1} parent=1 // pred_check_branch
      %68 = sbr.rel (0) target = $region29
    $region28: #{tpu_custom_call.1} parent=1 // pred_region
      %69 = dma.done [#allocation3], 128
    $region29: #{tpu_custom_call.1} parent=1 // pred_fallthru
      _
    // Predicated region
    $region30: #{tpu_custom_call.1} parent=1 // pred_check
      _
    $region31: #{tpu_custom_call.1} parent=1 // pred_check_branch
      %71 = sbr.rel (0) target = $region33
    $region32: #{tpu_custom_call.1} parent=1 // pred_region
      %72 = dma.done [#allocation6], 3072
    $region33: #{tpu_custom_call.1} parent=1 // pred_fallthru
      _
    // Predicated region
    $region34: #{tpu_custom_call.1} parent=1 // pred_check
      _
    $region35: #{tpu_custom_call.1} parent=1 // pred_check_branch
      %74 = sbr.rel (0) target = $region37
    $region36: #{tpu_custom_call.1} parent=1 // pred_region
      %75 = dma.done [#allocation6], 3072
    $region37: #{tpu_custom_call.1} parent=1 // pred_fallthru
      _
    // Predicated region
    $region38: #{tpu_custom_call.1} parent=1 // pred_check
      _
    $region39: #{tpu_custom_call.1} parent=1 // pred_check_branch
      %77 = sbr.rel (0) target = $region41
    $region40: #{tpu_custom_call.1} parent=1 // pred_region
      %78 = dma.done [#allocation9], 1024
    $region41: #{tpu_custom_call.1} parent=1 // pred_fallthru
      _
    %v80 = vld [vmem:[#allocation2] sm:$0xf]
    %v81 = vld [vmem:[#allocation2 + $0x4] sm:$0xf]
    %v82 = vmax.bf16 %v80, 0
    %v83 = vmax.bf16 %v81, 0
    %v84 = vld [vmem:[#allocation5] sm:$0xf]
    %v85 = vld [vmem:[#allocation5 + $0x4] sm:$0xf]
    %v86 = vld [vmem:[#allocation5 + $0x8] sm:$0xf]
    %v87 = vld [vmem:[#allocation5 + $0xc] sm:$0xf]
    %v88 = vld [vmem:[#allocation5 + $0x10] sm:$0xf]
    %v89 = vld [vmem:[#allocation5 + $0x14] sm:$0xf]
    %v90 = vld [vmem:[#allocation5 + $0x18] sm:$0xf]
    %v91 = vld [vmem:[#allocation5 + $0x1c] sm:$0xf]
    %v92 = vld [vmem:[#allocation5 + $0x20] sm:$0xf]
    %v93 = vld [vmem:[#allocation5 + $0x24] sm:$0xf]
    %v94 = vld [vmem:[#allocation5 + $0x28] sm:$0xf]
    %v95 = vld [vmem:[#allocation5 + $0x2c] sm:$0xf]
    %v96 = vld [vmem:[#allocation5 + $0x30] sm:$0xf]
    %v97 = vld [vmem:[#allocation5 + $0x34] sm:$0xf]
    %v98 = vld [vmem:[#allocation5 + $0x38] sm:$0xf]
    %v99 = vld [vmem:[#allocation5 + $0x3c] sm:$0xf]
    %v102 = vunpack.c.l.b16 %v82
    %v103 = vunpack.c.l.b16 %v83
    %v104 = vpack.c.b16 %v103, %v102
    %v122 = vunpack.c.l.b16 %v84
    %v123 = vunpack.c.l.b16 %v85
    %v124 = vunpack.c.l.b16 %v86
    %v125 = vunpack.c.l.b16 %v87
    %v126 = vunpack.c.l.b16 %v88
    %v127 = vunpack.c.l.b16 %v89
    %v128 = vunpack.c.l.b16 %v90
    %v129 = vunpack.c.l.b16 %v91
    %v130 = vunpack.c.l.b16 %v92
    %v131 = vunpack.c.l.b16 %v93
    %v132 = vunpack.c.l.b16 %v94
    %v133 = vunpack.c.l.b16 %v95
    %v134 = vunpack.c.l.b16 %v96
    %v135 = vunpack.c.l.b16 %v97
    %v136 = vunpack.c.l.b16 %v98
    %v137 = vunpack.c.l.b16 %v99
    %v138 = vpack.c.b16 %v123, %v122
    %v139 = vpack.c.b16 %v125, %v124
    %v140 = vpack.c.b16 %v127, %v126
    %v141 = vpack.c.b16 %v129, %v128
    %v142 = vpack.c.b16 %v131, %v130
    %v143 = vpack.c.b16 %v133, %v132
    %v144 = vpack.c.b16 %v135, %v134
    %v145 = vpack.c.b16 %v137, %v136
    %154 = vmatprep.subr.bf16.mxu0 0
    %155 = vmatpush1.bf16.msra.mxu0 %v145
    %156 = vmatprep.subr.bf16.mxu0 0
    %157 = vmatpush1.bf16.msra.mxu0 %v144
    %158 = vmatprep.subr.bf16.mxu0 0
    %159 = vmatpush1.bf16.msra.mxu0 %v143
    %160 = vmatprep.subr.bf16.mxu0 0
    %161 = vmatpush1.bf16.msra.mxu0 %v142
    %162 = vmatprep.subr.bf16.mxu0 0
    %163 = vmatpush1.bf16.msra.mxu0 %v141
    %164 = vmatprep.subr.bf16.mxu0 0
    %165 = vmatpush1.bf16.msra.mxu0 %v140
    %166 = vmatprep.subr.bf16.mxu0 0
    %167 = vmatpush1.bf16.msra.mxu0 %v139
    %168 = vmatprep.subr.bf16.mxu0 0
    %169 = vmatpush1.bf16.msra.mxu0 %v138
    %170 = vmatprep.subr.bf16.mxu0 0
    %171 = vmatpush2.bf16.msra.mxu0 0
    %172 = vmatprep.subr.bf16.mxu0 0
    %173 = vmatpush2.bf16.msra.mxu0 0
    %174 = vmatprep.subr.bf16.mxu0 0
    %175 = vmatpush2.bf16.msra.mxu0 0
    %176 = vmatprep.subr.bf16.mxu0 0
    %177 = vmatpush2.bf16.msra.mxu0 0
    %178 = vmatprep.subr.bf16.mxu0 0
    %179 = vmatpush2.bf16.msra.mxu0 0
    %180 = vmatprep.subr.bf16.mxu0 0
    %181 = vmatpush2.bf16.msra.mxu0 0
    %182 = vmatprep.subr.bf16.mxu0 0
    %183 = vmatpush2.bf16.msra.mxu0 0
    %184 = vmatprep.subr.bf16.mxu0 0
    %185 = vmatpush2.bf16.msra.mxu0 0
    %186 = vmatprep.mubr.bf16.mxu0 0
    %187 = vmatmul.mubr.bf16.gmra.mxu0 %v104
    %v188 = vpop.f32.mrf.mxu0
    %v189 = vadd.f32 0.0, %v188
    %v190 = vpop.f32.mrf.mxu0
    %v191 = vpop.f32.mrf.mxu0
    %v192 = vadd.f32 0.0, %v191
    %v193 = vpop.f32.mrf.mxu0
    %194 = vdwg.mxu0
    %s195 = scalar_lea.vmem [#allocation5], 64
    %v196 = vld [vmem:[%s195] sm:$0xf]
    %v197 = vld [vmem:[%s195 + $0x4] sm:$0xf]
    %v198 = vld [vmem:[%s195 + $0x8] sm:$0xf]
    %v199 = vld [vmem:[%s195 + $0xc] sm:$0xf]
    %v200 = vld [vmem:[%s195 + $0x10] sm:$0xf]
    %v201 = vld [vmem:[%s195 + $0x14] sm:$0xf]
    %v202 = vld [vmem:[%s195 + $0x18] sm:$0xf]
    %v203 = vld [vmem:[%s195 + $0x1c] sm:$0xf]
    %v204 = vld [vmem:[%s195 + $0x20] sm:$0xf]
    %v205 = vld [vmem:[%s195 + $0x24] sm:$0xf]
    %v206 = vld [vmem:[%s195 + $0x28] sm:$0xf]
    %v207 = vld [vmem:[%s195 + $0x2c] sm:$0xf]
    %v208 = vld [vmem:[%s195 + $0x30] sm:$0xf]
    %v209 = vld [vmem:[%s195 + $0x34] sm:$0xf]
    %v210 = vld [vmem:[%s195 + $0x38] sm:$0xf]
    %v211 = vld [vmem:[%s195 + $0x3c] sm:$0xf]
    %v228 = vunpack.c.l.b16 %v196
    %v229 = vunpack.c.l.b16 %v197
    %v230 = vunpack.c.l.b16 %v198
    %v231 = vunpack.c.l.b16 %v199
    %v232 = vunpack.c.l.b16 %v200
    %v233 = vunpack.c.l.b16 %v201
    %v234 = vunpack.c.l.b16 %v202
    %v235 = vunpack.c.l.b16 %v203
    %v236 = vunpack.c.l.b16 %v204
    %v237 = vunpack.c.l.b16 %v205
    %v238 = vunpack.c.l.b16 %v206
    %v239 = vunpack.c.l.b16 %v207
    %v240 = vunpack.c.l.b16 %v208
    %v241 = vunpack.c.l.b16 %v209
    %v242 = vunpack.c.l.b16 %v210
    %v243 = vunpack.c.l.b16 %v211
    %v244 = vpack.c.b16 %v229, %v228
    %v245 = vpack.c.b16 %v231, %v230
    %v246 = vpack.c.b16 %v233, %v232
    %v247 = vpack.c.b16 %v235, %v234
    %v248 = vpack.c.b16 %v237, %v236
    %v249 = vpack.c.b16 %v239, %v238
    %v250 = vpack.c.b16 %v241, %v240
    %v251 = vpack.c.b16 %v243, %v242
    %260 = vmatprep.subr.bf16.mxu0 0
    %261 = vmatpush1.bf16.msra.mxu0 %v251
    %262 = vmatprep.subr.bf16.mxu0 0
    %263 = vmatpush1.bf16.msra.mxu0 %v250
    %264 = vmatprep.subr.bf16.mxu0 0
    %265 = vmatpush1.bf16.msra.mxu0 %v249
    %266 = vmatprep.subr.bf16.mxu0 0
    %267 = vmatpush1.bf16.msra.mxu0 %v248
    %268 = vmatprep.subr.bf16.mxu0 0
    %269 = vmatpush1.bf16.msra.mxu0 %v247
    %270 = vmatprep.subr.bf16.mxu0 0
    %271 = vmatpush1.bf16.msra.mxu0 %v246
    %272 = vmatprep.subr.bf16.mxu0 0
    %273 = vmatpush1.bf16.msra.mxu0 %v245
    %274 = vmatprep.subr.bf16.mxu0 0
    %275 = vmatpush1.bf16.msra.mxu0 %v244
    %276 = vmatprep.subr.bf16.mxu0 0
    %277 = vmatpush2.bf16.msra.mxu0 0
    %278 = vmatprep.subr.bf16.mxu0 0
    %279 = vmatpush2.bf16.msra.mxu0 0
    %280 = vmatprep.subr.bf16.mxu0 0
    %281 = vmatpush2.bf16.msra.mxu0 0
    %282 = vmatprep.subr.bf16.mxu0 0
    %283 = vmatpush2.bf16.msra.mxu0 0
    %284 = vmatprep.subr.bf16.mxu0 0
    %285 = vmatpush2.bf16.msra.mxu0 0
    %286 = vmatprep.subr.bf16.mxu0 0
    %287 = vmatpush2.bf16.msra.mxu0 0
    %288 = vmatprep.subr.bf16.mxu0 0
    %289 = vmatpush2.bf16.msra.mxu0 0
    %290 = vmatprep.subr.bf16.mxu0 0
    %291 = vmatpush2.bf16.msra.mxu0 0
    %292 = vmatprep.mubr.bf16.mxu0 0
    %293 = vmatmul.mubr.bf16.gmra.mxu0 %v104
    %v294 = vpop.f32.mrf.mxu0
    %v295 = vadd.f32 0.0, %v294
    %v296 = vpop.f32.mrf.mxu0
    %v297 = vpop.f32.mrf.mxu0
    %v298 = vadd.f32 0.0, %v297
    %v299 = vpop.f32.mrf.mxu0
    %300 = vdwg.mxu0
    %s301 = scalar_lea.vmem [#allocation5], 128
    %v302 = vld [vmem:[%s301] sm:$0xf]
    %v303 = vld [vmem:[%s301 + $0x4] sm:$0xf]
    %v304 = vld [vmem:[%s301 + $0x8] sm:$0xf]
    %v305 = vld [vmem:[%s301 + $0xc] sm:$0xf]
    %v306 = vld [vmem:[%s301 + $0x10] sm:$0xf]
    %v307 = vld [vmem:[%s301 + $0x14] sm:$0xf]
    %v308 = vld [vmem:[%s301 + $0x18] sm:$0xf]
    %v309 = vld [vmem:[%s301 + $0x1c] sm:$0xf]
    %v310 = vld [vmem:[%s301 + $0x20] sm:$0xf]
    %v311 = vld [vmem:[%s301 + $0x24] sm:$0xf]
    %v312 = vld [vmem:[%s301 + $0x28] sm:$0xf]
    %v313 = vld [vmem:[%s301 + $0x2c] sm:$0xf]
    %v314 = vld [vmem:[%s301 + $0x30] sm:$0xf]
    %v315 = vld [vmem:[%s301 + $0x34] sm:$0xf]
    %v316 = vld [vmem:[%s301 + $0x38] sm:$0xf]
    %v317 = vld [vmem:[%s301 + $0x3c] sm:$0xf]
    %v334 = vunpack.c.l.b16 %v302
    %v335 = vunpack.c.l.b16 %v303
    %v336 = vunpack.c.l.b16 %v304
    %v337 = vunpack.c.l.b16 %v305
    %v338 = vunpack.c.l.b16 %v306
    %v339 = vunpack.c.l.b16 %v307
    %v340 = vunpack.c.l.b16 %v308
    %v341 = vunpack.c.l.b16 %v309
    %v342 = vunpack.c.l.b16 %v310
    %v343 = vunpack.c.l.b16 %v311
    %v344 = vunpack.c.l.b16 %v312
    %v345 = vunpack.c.l.b16 %v313
    %v346 = vunpack.c.l.b16 %v314
    %v347 = vunpack.c.l.b16 %v315
    %v348 = vunpack.c.l.b16 %v316
    %v349 = vunpack.c.l.b16 %v317
    %v350 = vpack.c.b16 %v335, %v334
    %v351 = vpack.c.b16 %v337, %v336
    %v352 = vpack.c.b16 %v339, %v338
    %v353 = vpack.c.b16 %v341, %v340
    %v354 = vpack.c.b16 %v343, %v342
    %v355 = vpack.c.b16 %v345, %v344
    %v356 = vpack.c.b16 %v347, %v346
    %v357 = vpack.c.b16 %v349, %v348
    %366 = vmatprep.subr.bf16.mxu0 0
    %367 = vmatpush1.bf16.msra.mxu0 %v357
    %368 = vmatprep.subr.bf16.mxu0 0
    %369 = vmatpush1.bf16.msra.mxu0 %v356
    %370 = vmatprep.subr.bf16.mxu0 0
    %371 = vmatpush1.bf16.msra.mxu0 %v355
    %372 = vmatprep.subr.bf16.mxu0 0
    %373 = vmatpush1.bf16.msra.mxu0 %v354
    %374 = vmatprep.subr.bf16.mxu0 0
    %375 = vmatpush1.bf16.msra.mxu0 %v353
    %376 = vmatprep.subr.bf16.mxu0 0
    %377 = vmatpush1.bf16.msra.mxu0 %v352
    %378 = vmatprep.subr.bf16.mxu0 0
    %379 = vmatpush1.bf16.msra.mxu0 %v351
    %380 = vmatprep.subr.bf16.mxu0 0
    %381 = vmatpush1.bf16.msra.mxu0 %v350
    %382 = vmatprep.subr.bf16.mxu0 0
    %383 = vmatpush2.bf16.msra.mxu0 0
    %384 = vmatprep.subr.bf16.mxu0 0
    %385 = vmatpush2.bf16.msra.mxu0 0
    %386 = vmatprep.subr.bf16.mxu0 0
    %387 = vmatpush2.bf16.msra.mxu0 0
    %388 = vmatprep.subr.bf16.mxu0 0
    %389 = vmatpush2.bf16.msra.mxu0 0
    %390 = vmatprep.subr.bf16.mxu0 0
    %391 = vmatpush2.bf16.msra.mxu0 0
    %392 = vmatprep.subr.bf16.mxu0 0
    %393 = vmatpush2.bf16.msra.mxu0 0
    %394 = vmatprep.subr.bf16.mxu0 0
    %395 = vmatpush2.bf16.msra.mxu0 0
    %396 = vmatprep.subr.bf16.mxu0 0
    %397 = vmatpush2.bf16.msra.mxu0 0
    %398 = vmatprep.mubr.bf16.mxu0 0
    %399 = vmatmul.mubr.bf16.gmra.mxu0 %v104
    %v400 = vpop.f32.mrf.mxu0
    %v401 = vadd.f32 0.0, %v400
    %v402 = vpop.f32.mrf.mxu0
    %v403 = vpop.f32.mrf.mxu0
    %v404 = vadd.f32 0.0, %v403
    %v405 = vpop.f32.mrf.mxu0
    %406 = vdwg.mxu0
    %vm409 = vcmask 1040384
    %v410 = vrot.slane %v189, 7
    %v411 = vrot.slane %v192, 7
    %v412 = vsel %vm409, %v410, %v411
    %v415 = vsel %vm409, 0.0, %v410
    %v416 = vadd.f32 %v295, %v415
    %v417 = vadd.f32 %v298, %v412
    %vm420 = vcmask 1046528
    %v421 = vrot.slane %v401, 1
    %v422 = vrot.slane %v404, 1
    %v423 = vsel %vm420, %v421, %v422
    %v426 = vsel %vm420, %v422, 0.0
    %v427 = vadd.f32 %v416, %v423
    %v428 = vadd.f32 %v417, %v426
    %v429 = vld [vmem:[%s4] sm:$0x1]
    %v431 = vlaneseq
    %v432 = vshrl.u32 %v431, 7
    %v433 = vsub.s32 0, %v432
    %v434 = vrot.slane %v429, %v433
    %v436 = vadd.f32 %v427, %v434
    %v437 = vadd.f32 %v428, %v434
    %v438 = vmax.f32 %v436, 0.0
    %v439 = vmax.f32 %v437, 0.0
    %v440 = vpack.c.bf16 %v439, %v438
    %v441 = vld [vmem:[#allocation7] sm:$0xf]
    %v442 = vld [vmem:[#allocation7 + $0x4] sm:$0xf]
    %v443 = vld [vmem:[#allocation7 + $0x8] sm:$0xf]
    %v444 = vld [vmem:[#allocation7 + $0xc] sm:$0xf]
    %v445 = vld [vmem:[#allocation7 + $0x10] sm:$0xf]
    %v446 = vld [vmem:[#allocation7 + $0x14] sm:$0xf]
    %v447 = vld [vmem:[#allocation7 + $0x18] sm:$0xf]
    %v448 = vld [vmem:[#allocation7 + $0x1c] sm:$0xf]
    %v449 = vld [vmem:[#allocation7 + $0x20] sm:$0xf]
    %v450 = vld [vmem:[#allocation7 + $0x24] sm:$0xf]
    %v451 = vld [vmem:[#allocation7 + $0x28] sm:$0xf]
    %v452 = vld [vmem:[#allocation7 + $0x2c] sm:$0xf]
    %v453 = vld [vmem:[#allocation7 + $0x30] sm:$0xf]
    %v454 = vld [vmem:[#allocation7 + $0x34] sm:$0xf]
    %v455 = vld [vmem:[#allocation7 + $0x38] sm:$0xf]
    %v456 = vld [vmem:[#allocation7 + $0x3c] sm:$0xf]
    %v473 = vunpack.c.l.b16 %v441
    %v474 = vunpack.c.l.b16 %v442
    %v475 = vunpack.c.l.b16 %v443
    %v476 = vunpack.c.l.b16 %v444
    %v477 = vunpack.c.l.b16 %v445
    %v478 = vunpack.c.l.b16 %v446
    %v479 = vunpack.c.l.b16 %v447
    %v480 = vunpack.c.l.b16 %v448
    %v481 = vunpack.c.l.b16 %v449
    %v482 = vunpack.c.l.b16 %v450
    %v483 = vunpack.c.l.b16 %v451
    %v484 = vunpack.c.l.b16 %v452
    %v485 = vunpack.c.l.b16 %v453
    %v486 = vunpack.c.l.b16 %v454
    %v487 = vunpack.c.l.b16 %v455
    %v488 = vunpack.c.l.b16 %v456
    %v489 = vpack.c.b16 %v474, %v473
    %v490 = vpack.c.b16 %v476, %v475
    %v491 = vpack.c.b16 %v478, %v477
    %v492 = vpack.c.b16 %v480, %v479
    %v493 = vpack.c.b16 %v482, %v481
    %v494 = vpack.c.b16 %v484, %v483
    %v495 = vpack.c.b16 %v486, %v485
    %v496 = vpack.c.b16 %v488, %v487
    %505 = vmatprep.subr.bf16.mxu0 0
    %506 = vmatpush1.bf16.msra.mxu0 %v496
    %507 = vmatprep.subr.bf16.mxu0 0
    %508 = vmatpush1.bf16.msra.mxu0 %v495
    %509 = vmatprep.subr.bf16.mxu0 0
    %510 = vmatpush1.bf16.msra.mxu0 %v494
    %511 = vmatprep.subr.bf16.mxu0 0
    %512 = vmatpush1.bf16.msra.mxu0 %v493
    %513 = vmatprep.subr.bf16.mxu0 0
    %514 = vmatpush1.bf16.msra.mxu0 %v492
    %515 = vmatprep.subr.bf16.mxu0 0
    %516 = vmatpush1.bf16.msra.mxu0 %v491
    %517 = vmatprep.subr.bf16.mxu0 0
    %518 = vmatpush1.bf16.msra.mxu0 %v490
    %519 = vmatprep.subr.bf16.mxu0 0
    %520 = vmatpush1.bf16.msra.mxu0 %v489
    %521 = vmatprep.subr.bf16.mxu0 0
    %522 = vmatpush2.bf16.msra.mxu0 0
    %523 = vmatprep.subr.bf16.mxu0 0
    %524 = vmatpush2.bf16.msra.mxu0 0
    %525 = vmatprep.subr.bf16.mxu0 0
    %526 = vmatpush2.bf16.msra.mxu0 0
    %527 = vmatprep.subr.bf16.mxu0 0
    %528 = vmatpush2.bf16.msra.mxu0 0
    %529 = vmatprep.subr.bf16.mxu0 0
    %530 = vmatpush2.bf16.msra.mxu0 0
    %531 = vmatprep.subr.bf16.mxu0 0
    %532 = vmatpush2.bf16.msra.mxu0 0
    %533 = vmatprep.subr.bf16.mxu0 0
    %534 = vmatpush2.bf16.msra.mxu0 0
    %535 = vmatprep.subr.bf16.mxu0 0
    %536 = vmatpush2.bf16.msra.mxu0 0
    %537 = vmatprep.mubr.bf16.mxu0 0
    %538 = vmatmul.mubr.bf16.gmra.mxu0 %v440
    %v539 = vpop.f32.mrf.mxu0
    %v540 = vadd.f32 0.0, %v539
    %v541 = vpop.f32.mrf.mxu0
    %v542 = vpop.f32.mrf.mxu0
    %v543 = vadd.f32 0.0, %v542
    %v544 = vpop.f32.mrf.mxu0
    %545 = vdwg.mxu0
    %s546 = scalar_lea.vmem [#allocation7], 64
    %v547 = vld [vmem:[%s546] sm:$0xf]
    %v548 = vld [vmem:[%s546 + $0x4] sm:$0xf]
    %v549 = vld [vmem:[%s546 + $0x8] sm:$0xf]
    %v550 = vld [vmem:[%s546 + $0xc] sm:$0xf]
    %v551 = vld [vmem:[%s546 + $0x10] sm:$0xf]
    %v552 = vld [vmem:[%s546 + $0x14] sm:$0xf]
    %v553 = vld [vmem:[%s546 + $0x18] sm:$0xf]
    %v554 = vld [vmem:[%s546 + $0x1c] sm:$0xf]
    %v555 = vld [vmem:[%s546 + $0x20] sm:$0xf]
    %v556 = vld [vmem:[%s546 + $0x24] sm:$0xf]
    %v557 = vld [vmem:[%s546 + $0x28] sm:$0xf]
    %v558 = vld [vmem:[%s546 + $0x2c] sm:$0xf]
    %v559 = vld [vmem:[%s546 + $0x30] sm:$0xf]
    %v560 = vld [vmem:[%s546 + $0x34] sm:$0xf]
    %v561 = vld [vmem:[%s546 + $0x38] sm:$0xf]
    %v562 = vld [vmem:[%s546 + $0x3c] sm:$0xf]
    %v579 = vunpack.c.l.b16 %v547
    %v580 = vunpack.c.l.b16 %v548
    %v581 = vunpack.c.l.b16 %v549
    %v582 = vunpack.c.l.b16 %v550
    %v583 = vunpack.c.l.b16 %v551
    %v584 = vunpack.c.l.b16 %v552
    %v585 = vunpack.c.l.b16 %v553
    %v586 = vunpack.c.l.b16 %v554
    %v587 = vunpack.c.l.b16 %v555
    %v588 = vunpack.c.l.b16 %v556
    %v589 = vunpack.c.l.b16 %v557
    %v590 = vunpack.c.l.b16 %v558
    %v591 = vunpack.c.l.b16 %v559
    %v592 = vunpack.c.l.b16 %v560
    %v593 = vunpack.c.l.b16 %v561
    %v594 = vunpack.c.l.b16 %v562
    %v595 = vpack.c.b16 %v580, %v579
    %v596 = vpack.c.b16 %v582, %v581
    %v597 = vpack.c.b16 %v584, %v583
    %v598 = vpack.c.b16 %v586, %v585
    %v599 = vpack.c.b16 %v588, %v587
    %v600 = vpack.c.b16 %v590, %v589
    %v601 = vpack.c.b16 %v592, %v591
    %v602 = vpack.c.b16 %v594, %v593
    %611 = vmatprep.subr.bf16.mxu0 0
    %612 = vmatpush1.bf16.msra.mxu0 %v602
    %613 = vmatprep.subr.bf16.mxu0 0
    %614 = vmatpush1.bf16.msra.mxu0 %v601
    %615 = vmatprep.subr.bf16.mxu0 0
    %616 = vmatpush1.bf16.msra.mxu0 %v600
    %617 = vmatprep.subr.bf16.mxu0 0
    %618 = vmatpush1.bf16.msra.mxu0 %v599
    %619 = vmatprep.subr.bf16.mxu0 0
    %620 = vmatpush1.bf16.msra.mxu0 %v598
    %621 = vmatprep.subr.bf16.mxu0 0
    %622 = vmatpush1.bf16.msra.mxu0 %v597
    %623 = vmatprep.subr.bf16.mxu0 0
    %624 = vmatpush1.bf16.msra.mxu0 %v596
    %625 = vmatprep.subr.bf16.mxu0 0
    %626 = vmatpush1.bf16.msra.mxu0 %v595
    %627 = vmatprep.subr.bf16.mxu0 0
    %628 = vmatpush2.bf16.msra.mxu0 0
    %629 = vmatprep.subr.bf16.mxu0 0
    %630 = vmatpush2.bf16.msra.mxu0 0
    %631 = vmatprep.subr.bf16.mxu0 0
    %632 = vmatpush2.bf16.msra.mxu0 0
    %633 = vmatprep.subr.bf16.mxu0 0
    %634 = vmatpush2.bf16.msra.mxu0 0
    %635 = vmatprep.subr.bf16.mxu0 0
    %636 = vmatpush2.bf16.msra.mxu0 0
    %637 = vmatprep.subr.bf16.mxu0 0
    %638 = vmatpush2.bf16.msra.mxu0 0
    %639 = vmatprep.subr.bf16.mxu0 0
    %640 = vmatpush2.bf16.msra.mxu0 0
    %641 = vmatprep.subr.bf16.mxu0 0
    %642 = vmatpush2.bf16.msra.mxu0 0
    %643 = vmatprep.mubr.bf16.mxu0 0
    %644 = vmatmul.mubr.bf16.gmra.mxu0 %v440
    %v645 = vpop.f32.mrf.mxu0
    %v646 = vadd.f32 0.0, %v645
    %v647 = vpop.f32.mrf.mxu0
    %v648 = vpop.f32.mrf.mxu0
    %v649 = vadd.f32 0.0, %v648
    %v650 = vpop.f32.mrf.mxu0
    %651 = vdwg.mxu0
    %s652 = scalar_lea.vmem [#allocation7], 128
    %v653 = vld [vmem:[%s652] sm:$0xf]
    %v654 = vld [vmem:[%s652 + $0x4] sm:$0xf]
    %v655 = vld [vmem:[%s652 + $0x8] sm:$0xf]
    %v656 = vld [vmem:[%s652 + $0xc] sm:$0xf]
    %v657 = vld [vmem:[%s652 + $0x10] sm:$0xf]
    %v658 = vld [vmem:[%s652 + $0x14] sm:$0xf]
    %v659 = vld [vmem:[%s652 + $0x18] sm:$0xf]
    %v660 = vld [vmem:[%s652 + $0x1c] sm:$0xf]
    %v661 = vld [vmem:[%s652 + $0x20] sm:$0xf]
    %v662 = vld [vmem:[%s652 + $0x24] sm:$0xf]
    %v663 = vld [vmem:[%s652 + $0x28] sm:$0xf]
    %v664 = vld [vmem:[%s652 + $0x2c] sm:$0xf]
    %v665 = vld [vmem:[%s652 + $0x30] sm:$0xf]
    %v666 = vld [vmem:[%s652 + $0x34] sm:$0xf]
    %v667 = vld [vmem:[%s652 + $0x38] sm:$0xf]
    %v668 = vld [vmem:[%s652 + $0x3c] sm:$0xf]
    %v685 = vunpack.c.l.b16 %v653
    %v686 = vunpack.c.l.b16 %v654
    %v687 = vunpack.c.l.b16 %v655
    %v688 = vunpack.c.l.b16 %v656
    %v689 = vunpack.c.l.b16 %v657
    %v690 = vunpack.c.l.b16 %v658
    %v691 = vunpack.c.l.b16 %v659
    %v692 = vunpack.c.l.b16 %v660
    %v693 = vunpack.c.l.b16 %v661
    %v694 = vunpack.c.l.b16 %v662
    %v695 = vunpack.c.l.b16 %v663
    %v696 = vunpack.c.l.b16 %v664
    %v697 = vunpack.c.l.b16 %v665
    %v698 = vunpack.c.l.b16 %v666
    %v699 = vunpack.c.l.b16 %v667
    %v700 = vunpack.c.l.b16 %v668
    %v701 = vpack.c.b16 %v686, %v685
    %v702 = vpack.c.b16 %v688, %v687
    %v703 = vpack.c.b16 %v690, %v689
    %v704 = vpack.c.b16 %v692, %v691
    %v705 = vpack.c.b16 %v694, %v693
    %v706 = vpack.c.b16 %v696, %v695
    %v707 = vpack.c.b16 %v698, %v697
    %v708 = vpack.c.b16 %v700, %v699
    %717 = vmatprep.subr.bf16.mxu0 0
    %718 = vmatpush1.bf16.msra.mxu0 %v708
    %719 = vmatprep.subr.bf16.mxu0 0
    %720 = vmatpush1.bf16.msra.mxu0 %v707
    %721 = vmatprep.subr.bf16.mxu0 0
    %722 = vmatpush1.bf16.msra.mxu0 %v706
    %723 = vmatprep.subr.bf16.mxu0 0
    %724 = vmatpush1.bf16.msra.mxu0 %v705
    %725 = vmatprep.subr.bf16.mxu0 0
    %726 = vmatpush1.bf16.msra.mxu0 %v704
    %727 = vmatprep.subr.bf16.mxu0 0
    %728 = vmatpush1.bf16.msra.mxu0 %v703
    %729 = vmatprep.subr.bf16.mxu0 0
    %730 = vmatpush1.bf16.msra.mxu0 %v702
    %731 = vmatprep.subr.bf16.mxu0 0
    %732 = vmatpush1.bf16.msra.mxu0 %v701
    %733 = vmatprep.subr.bf16.mxu0 0
    %734 = vmatpush2.bf16.msra.mxu0 0
    %735 = vmatprep.subr.bf16.mxu0 0
    %736 = vmatpush2.bf16.msra.mxu0 0
    %737 = vmatprep.subr.bf16.mxu0 0
    %738 = vmatpush2.bf16.msra.mxu0 0
    %739 = vmatprep.subr.bf16.mxu0 0
    %740 = vmatpush2.bf16.msra.mxu0 0
    %741 = vmatprep.subr.bf16.mxu0 0
    %742 = vmatpush2.bf16.msra.mxu0 0
    %743 = vmatprep.subr.bf16.mxu0 0
    %744 = vmatpush2.bf16.msra.mxu0 0
    %745 = vmatprep.subr.bf16.mxu0 0
    %746 = vmatpush2.bf16.msra.mxu0 0
    %747 = vmatprep.subr.bf16.mxu0 0
    %748 = vmatpush2.bf16.msra.mxu0 0
    %749 = vmatprep.mubr.bf16.mxu0 0
    %750 = vmatmul.mubr.bf16.gmra.mxu0 %v440
    %v751 = vpop.f32.mrf.mxu0
    %v752 = vadd.f32 0.0, %v751
    %v753 = vpop.f32.mrf.mxu0
    %v754 = vpop.f32.mrf.mxu0
    %v755 = vadd.f32 0.0, %v754
    %v756 = vpop.f32.mrf.mxu0
    %757 = vdwg.mxu0
    %v760 = vrot.slane %v540, 7
    %v761 = vrot.slane %v543, 7
    %v762 = vsel %vm409, %v760, %v761
    %v765 = vsel %vm409, 0.0, %v760
    %v766 = vadd.f32 %v646, %v765
    %v767 = vadd.f32 %v649, %v762
    %v770 = vrot.slane %v752, 1
    %v771 = vrot.slane %v755, 1
    %v772 = vsel %vm420, %v770, %v771
    %v775 = vsel %vm420, %v771, 0.0
    %v776 = vadd.f32 %v766, %v772
    %v777 = vadd.f32 %v767, %v775
    %v778 = vld [vmem:[#allocation8] sm:$0xf]
    %v779 = vld [vmem:[#allocation8 + $0x4] sm:$0xf]
    %v780 = vld [vmem:[#allocation8 + $0x8] sm:$0xf]
    %v781 = vld [vmem:[#allocation8 + $0xc] sm:$0xf]
    %v782 = vld [vmem:[#allocation8 + $0x10] sm:$0xf]
    %v783 = vld [vmem:[#allocation8 + $0x14] sm:$0xf]
    %v784 = vld [vmem:[#allocation8 + $0x18] sm:$0xf]
    %v785 = vld [vmem:[#allocation8 + $0x1c] sm:$0xf]
    %v786 = vld [vmem:[#allocation8 + $0x20] sm:$0xf]
    %v787 = vld [vmem:[#allocation8 + $0x24] sm:$0xf]
    %v788 = vld [vmem:[#allocation8 + $0x28] sm:$0xf]
    %v789 = vld [vmem:[#allocation8 + $0x2c] sm:$0xf]
    %v790 = vld [vmem:[#allocation8 + $0x30] sm:$0xf]
    %v791 = vld [vmem:[#allocation8 + $0x34] sm:$0xf]
    %v792 = vld [vmem:[#allocation8 + $0x38] sm:$0xf]
    %v793 = vld [vmem:[#allocation8 + $0x3c] sm:$0xf]
    %v796 = vunpack.c.l.b16 %v80
    %v797 = vunpack.c.l.b16 %v81
    %v798 = vpack.c.b16 %v797, %v796
    %v816 = vunpack.c.l.b16 %v778
    %v817 = vunpack.c.l.b16 %v779
    %v818 = vunpack.c.l.b16 %v780
    %v819 = vunpack.c.l.b16 %v781
    %v820 = vunpack.c.l.b16 %v782
    %v821 = vunpack.c.l.b16 %v783
    %v822 = vunpack.c.l.b16 %v784
    %v823 = vunpack.c.l.b16 %v785
    %v824 = vunpack.c.l.b16 %v786
    %v825 = vunpack.c.l.b16 %v787
    %v826 = vunpack.c.l.b16 %v788
    %v827 = vunpack.c.l.b16 %v789
    %v828 = vunpack.c.l.b16 %v790
    %v829 = vunpack.c.l.b16 %v791
    %v830 = vunpack.c.l.b16 %v792
    %v831 = vunpack.c.l.b16 %v793
    %v832 = vpack.c.b16 %v817, %v816
    %v833 = vpack.c.b16 %v819, %v818
    %v834 = vpack.c.b16 %v821, %v820
    %v835 = vpack.c.b16 %v823, %v822
    %v836 = vpack.c.b16 %v825, %v824
    %v837 = vpack.c.b16 %v827, %v826
    %v838 = vpack.c.b16 %v829, %v828
    %v839 = vpack.c.b16 %v831, %v830
    %848 = vmatprep.subr.bf16.mxu0 0
    %849 = vmatpush1.bf16.msra.mxu0 %v839
    %850 = vmatprep.subr.bf16.mxu0 0
    %851 = vmatpush1.bf16.msra.mxu0 %v838
    %852 = vmatprep.subr.bf16.mxu0 0
    %853 = vmatpush1.bf16.msra.mxu0 %v837
    %854 = vmatprep.subr.bf16.mxu0 0
    %855 = vmatpush1.bf16.msra.mxu0 %v836
    %856 = vmatprep.subr.bf16.mxu0 0
    %857 = vmatpush1.bf16.msra.mxu0 %v835
    %858 = vmatprep.subr.bf16.mxu0 0
    %859 = vmatpush1.bf16.msra.mxu0 %v834
    %860 = vmatprep.subr.bf16.mxu0 0
    %861 = vmatpush1.bf16.msra.mxu0 %v833
    %862 = vmatprep.subr.bf16.mxu0 0
    %863 = vmatpush1.bf16.msra.mxu0 %v832
    %864 = vmatprep.subr.bf16.mxu0 0
    %865 = vmatpush2.bf16.msra.mxu0 0
    %866 = vmatprep.subr.bf16.mxu0 0
    %867 = vmatpush2.bf16.msra.mxu0 0
    %868 = vmatprep.subr.bf16.mxu0 0
    %869 = vmatpush2.bf16.msra.mxu0 0
    %870 = vmatprep.subr.bf16.mxu0 0
    %871 = vmatpush2.bf16.msra.mxu0 0
    %872 = vmatprep.subr.bf16.mxu0 0
    %873 = vmatpush2.bf16.msra.mxu0 0
    %874 = vmatprep.subr.bf16.mxu0 0
    %875 = vmatpush2.bf16.msra.mxu0 0
    %876 = vmatprep.subr.bf16.mxu0 0
    %877 = vmatpush2.bf16.msra.mxu0 0
    %878 = vmatprep.subr.bf16.mxu0 0
    %879 = vmatpush2.bf16.msra.mxu0 0
    %880 = vmatprep.mubr.bf16.mxu0 0
    %881 = vmatmul.mubr.bf16.gmra.mxu0 %v798
    %v882 = vpop.f32.mrf.mxu0
    %v883 = vadd.f32 0.0, %v882
    %v884 = vpop.f32.mrf.mxu0
    %v885 = vpop.f32.mrf.mxu0
    %v886 = vadd.f32 0.0, %v885
    %v887 = vpop.f32.mrf.mxu0
    %888 = vdwg.mxu0
    %v889 = vadd.f32 %v776, %v883
    %v890 = vadd.f32 %v777, %v886
    %v893 = vcombine.high %v889, %v889
    %v895 = vunpack.c.l.s4 1983009808
    %v896 = vunpack.c.0.s8 %v895
    %v897 = vlaneseq
    %v898 = vshrl.u32 %v897, 7
    %v899 = vsub.s32 %v896, %v898
    %v900 = vrot.slane %v889, %v899
    %v902 = vunpack.c.l.s4 1983009808
    %v903 = vunpack.c.0.s8 %v902
    %v904 = vlaneseq
    %v905 = vshrl.u32 %v904, 7
    %v906 = vsub.s32 %v903, %v905
    %v907 = vrot.slane %v893, %v906
    %v908 = vcombine.high %v900, %v900
    %v909 = vcombine.high %v907, %v907
    %v910 = vcombine.high %v890, %v890
    %v912 = vunpack.c.l.s4 1983009808
    %v913 = vunpack.c.0.s8 %v912
    %v914 = vlaneseq
    %v915 = vshrl.u32 %v914, 7
    %v916 = vsub.s32 %v913, %v915
    %v917 = vrot.slane %v890, %v916
    %v919 = vunpack.c.l.s4 1983009808
    %v920 = vunpack.c.0.s8 %v919
    %v921 = vlaneseq
    %v922 = vshrl.u32 %v921, 7
    %v923 = vsub.s32 %v920, %v922
    %v924 = vrot.slane %v910, %v923
    %v925 = vcombine.high %v917, %v917
    %v926 = vcombine.high %v924, %v924
    %v935 = vrot.slane %v900, 7
    %v936 = vrot.slane %v935, 2
    %v937 = vrot.slane %v908, 7
    %v938 = vrot.slane %v937, 2
    %v939 = vrot.slane %v907, 7
    %v940 = vrot.slane %v939, 2
    %v941 = vrot.slane %v909, 7
    %v942 = vrot.slane %v941, 2
    %v943 = vrot.slane %v917, 7
    %v944 = vrot.slane %v943, 2
    %v945 = vrot.slane %v925, 7
    %v946 = vrot.slane %v945, 2
    %v947 = vrot.slane %v924, 7
    %v948 = vrot.slane %v947, 2
    %v949 = vrot.slane %v926, 7
    %v950 = vrot.slane %v949, 2
    %v959 = vadd.f32 %v900, %v936
    %v960 = vadd.f32 %v908, %v938
    %v961 = vadd.f32 %v907, %v940
    %v962 = vadd.f32 %v909, %v942
    %v963 = vadd.f32 %v917, %v944
    %v964 = vadd.f32 %v925, %v946
    %v965 = vadd.f32 %v924, %v948
    %v966 = vadd.f32 %v926, %v950
    %v967 = vmul.f32 %v959, 0.25
    %v968 = vmul.f32 %v960, 0.25
    %v969 = vmul.f32 %v961, 0.25
    %v970 = vmul.f32 %v962, 0.25
    %v971 = vmul.f32 %v963, 0.25
    %v972 = vmul.f32 %v964, 0.25
    %v973 = vmul.f32 %v965, 0.25
    %v974 = vmul.f32 %v966, 0.25
    %v975 = vld [vmem:[%s5] sm:$0x1]
    %v977 = vlaneseq
    %v978 = vshrl.u32 %v977, 7
    %v979 = vsub.s32 0, %v978
    %v980 = vrot.slane %v975, %v979
    %v981 = vcombine.high %v980, %v980
    %v983 = vunpack.c.l.s4 1983009808
    %v984 = vunpack.c.0.s8 %v983
    %v985 = vlaneseq
    %v986 = vshrl.u32 %v985, 7
    %v987 = vsub.s32 %v984, %v986
    %v988 = vrot.slane %v980, %v987
    %v990 = vunpack.c.l.s4 1983009808
    %v991 = vunpack.c.0.s8 %v990
    %v992 = vlaneseq
    %v993 = vshrl.u32 %v992, 7
    %v994 = vsub.s32 %v991, %v993
    %v995 = vrot.slane %v981, %v994
    %v996 = vcombine.high %v988, %v988
    %v997 = vcombine.high %v995, %v995
    %v998 = vrot.slane %v988, 1
    %v999 = vrot.slane %v996, 1
    %v1000 = vrot.slane %v995, 1
    %v1001 = vrot.slane %v997, 1
    %v1010 = vadd.f32 %v967, %v988
    %v1011 = vadd.f32 %v968, %v998
    %v1012 = vadd.f32 %v969, %v996
    %v1013 = vadd.f32 %v970, %v999
    %v1014 = vadd.f32 %v971, %v995
    %v1015 = vadd.f32 %v972, %v1000
    %v1016 = vadd.f32 %v973, %v997
    %v1017 = vadd.f32 %v974, %v1001
    %v1026 = vlaneseq
    %v1027 = vshrl.u32 %v1026, 7
    %v1028 = vsub.s32 0, %v1027
    %v1029 = vrot.slane %v1010, %v1028
    %v1030 = vlaneseq
    %v1031 = vshrl.u32 %v1030, 7
    %v1032 = vsub.s32 0, %v1031
    %v1033 = vrot.slane %v1011, %v1032
    %v1034 = vlaneseq
    %v1035 = vshrl.u32 %v1034, 7
    %v1036 = vsub.s32 0, %v1035
    %v1037 = vrot.slane %v1012, %v1036
    %v1038 = vlaneseq
    %v1039 = vshrl.u32 %v1038, 7
    %v1040 = vsub.s32 0, %v1039
    %v1041 = vrot.slane %v1013, %v1040
    %v1042 = vlaneseq
    %v1043 = vshrl.u32 %v1042, 7
    %v1044 = vsub.s32 0, %v1043
    %v1045 = vrot.slane %v1014, %v1044
    %v1046 = vlaneseq
    %v1047 = vshrl.u32 %v1046, 7
    %v1048 = vsub.s32 0, %v1047
    %v1049 = vrot.slane %v1015, %v1048
    %v1050 = vlaneseq
    %v1051 = vshrl.u32 %v1050, 7
    %v1052 = vsub.s32 0, %v1051
    %v1053 = vrot.slane %v1016, %v1052
    %v1054 = vlaneseq
    %v1055 = vshrl.u32 %v1054, 7
    %v1056 = vsub.s32 0, %v1055
    %v1057 = vrot.slane %v1017, %v1056
    %vm1058 = vcmask 1041409
    %v1059 = vsel %vm1058, %v1033, %v1029
    %vm1060 = vcmask 1042434
    %v1061 = vsel %vm1060, %v1037, %v1059
    %vm1062 = vcmask 1043459
    %v1063 = vsel %vm1062, %v1041, %v1061
    %vm1064 = vcmask 1044484
    %v1065 = vsel %vm1064, %v1045, %v1063
    %vm1066 = vcmask 1045509
    %v1067 = vsel %vm1066, %v1049, %v1065
    %vm1068 = vcmask 1046534
    %v1069 = vsel %vm1068, %v1053, %v1067
    %vm1070 = vcmask 1047559
    %v1071 = vsel %vm1070, %v1057, %v1069
    %1073 = vst [vmem:[#allocation10] sm:$0xff] %v1071
    // Predicated region
    $region42: #{tpu_custom_call.1} parent=1 // pred_check
      _
    $region43: #{tpu_custom_call.1} parent=1 // pred_check_branch
      %1075 = sbr.rel (0) target = $region45
    $region44: #{tpu_custom_call.1} parent=1 // pred_region
      %s1077 = ssub.s32 128, 128
      %1078 = vsyncadd [#allocation4], %s1077
      %s1080 = sshll.u32 [#allocation10], 4
      %s1081 = int_to_ptr.vmem [resolvable:$true] %s1080
      %1083 = dma.vmem_to_hbm [thread:$0]  %s1081, 128, %s6, [#allocation4]
    $region45: #{tpu_custom_call.1} parent=1 // pred_fallthru
      _
    // Predicated region
    $region46: #{tpu_custom_call.1} parent=1 // pred_check
      _
    $region47: #{tpu_custom_call.1} parent=1 // pred_check_branch
      %1085 = sbr.rel (0) target = $region49
    $region48: #{tpu_custom_call.1} parent=1 // pred_region
      %1086 = dma.done [#allocation4], 128
    $region49: #{tpu_custom_call.1} parent=1 // pred_fallthru
      _
    %1087 = vsyncpa [#allocation3], 1
    %1088 = vsyncpa [#allocation6], 1
    %1089 = vsyncpa [#allocation9], 1
    %1090 = vsyncpa [#allocation4], 1

// kernel: tpu_custom_call.1
$region0: #{tpu_custom_call.1}
  #allocation0 [shape = 'u32[]', space=smem, size = 0x4, offset = 0x4, fixed_abs, tag = 'smem constant byte address 0x4 - core index']
  #allocation1 [shape = 'u32[144,128]{1,0:T(1,128)}', space=vmem, size = 0x12000, scoped, tag = 'internal scratch']
  %s0 = inlined_call_operand.hbm [shape: bf16[1,16,128], index: 0, kind: input, shape index: {}]
  %s1 = inlined_call_operand.hbm [shape: bf16[3,128,128], index: 1, kind: input, shape index: {}]
  %s2 = inlined_call_operand.hbm [shape: bf16[3,128,128], index: 2, kind: input, shape index: {}]
  %s3 = inlined_call_operand.hbm [shape: bf16[128,128], index: 3, kind: input, shape index: {}]
  %s4 = inlined_call_operand.vmem [shape: f32[1,128], index: 4, kind: input, shape index: {}]
  %s5 = inlined_call_operand.vmem [shape: f32[1,128], index: 5, kind: input, shape index: {}]
  %s6 = inlined_call_operand.hbm [shape: f32[8,128], index: 6, kind: output, shape index: {}]
  %s7 = sld [smem:[#allocation0]]
  $region50: #{tpu_custom_call.1} parent=0
    _
  %s9 = ssub.s32 1, %s7
  %s10 = scalar_select 0, %s9, %s7
  $region1: #{tpu_custom_call.1} parent=0
    #allocation2 [shape = 'u8[4096]{0}', space=vmem, size = 0x1000, scoped, tag = 'input window, operand 0, single buffered']
    #allocation3 [shape = 's32[1]{0}', space=sflag, size = 0x4, scoped, tag = 'scoped memory for tpu_custom_call.1']
    #allocation4 [shape = 's32[1]{0}', space=sflag, size = 0x4, scoped, tag = 'scoped memory for tpu_custom_call.1']
    #allocation5 [shape = 'u8[98304]{0}', space=vmem, size = 0x18000, scoped, tag = 'input window, operand 1, single buffered']
    #allocation6 [shape = 's32[1]{0}', space=sflag, size = 0x4, scoped, tag = 'scoped memory for tpu_custom_call.1']
    #allocation7 [shape = 'u8[98304]{0}', space=vmem, size = 0x18000, scoped, tag = 'input window, operand 2, single buffered']
    #allocation8 [shape = 'u8[32768]{0}', space=vmem, size = 0x8000, scoped, tag = 'input window, operand 3, single buffered']
    #allocation9 [shape = 's32[1]{0}', space=sflag, size = 0x4, scoped, tag = 'scoped memory for tpu_custom_call.1']
    #allocation10 [shape = 'u8[4096]{0}', space=vmem, size = 0x1000, scoped, tag = 'output window, operand 0, single buffered']
    %11 = vsyncpa [#allocation3], 0
    %12 = vsyncpa [#allocation6], 0
    %13 = vsyncpa [#allocation9], 0
    %14 = vsyncpa [#allocation4], 0
    // Predicated region
    $region2: #{tpu_custom_call.1} parent=1 // pred_check
      _
    $region3: #{tpu_custom_call.1} parent=1 // pred_check_branch
      %16 = sbr.rel (0) target = $region5
    $region4: #{tpu_custom_call.1} parent=1 // pred_region
      %s18 = ssub.s32 128, 128
      %19 = vsyncadd [#allocation3], %s18
      %s20 = sshll.u32 [#allocation2], 4
      %s21 = int_to_ptr.vmem [resolvable:$true] %s20
      %26 = dma.hbm_to_vmem [thread:$0]  %s0, 128, %s21, [#allocation3], 64, 64, 4
    $region5: #{tpu_custom_call.1} parent=1 // pred_fallthru
      _
    // Predicated region
    $region6: #{tpu_custom_call.1} parent=1 // pred_check
      _
    $region7: #{tpu_custom_call.1} parent=1 // pred_check_branch
      %28 = sbr.rel (0) target = $region9
    $region8: #{tpu_custom_call.1} parent=1 // pred_region
      %s30 = ssub.s32 3072, 3072
      %31 = vsyncadd [#allocation6], %s30
      %s32 = sshll.u32 [#allocation5], 4
      %s33 = int_to_ptr.vmem [resolvable:$true] %s32
      %38 = dma.hbm_to_vmem [thread:$0]  %s1, 3072, %s33, [#allocation6], 64, 64, 4
    $region9: #{tpu_custom_call.1} parent=1 // pred_fallthru
      _
    // Predicated region
    $region10: #{tpu_custom_call.1} parent=1 // pred_check
      _
    $region11: #{tpu_custom_call.1} parent=1 // pred_check_branch
      %40 = sbr.rel (0) target = $region13
    $region12: #{tpu_custom_call.1} parent=1 // pred_region
      %s42 = ssub.s32 3072, 3072
      %43 = vsyncadd [#allocation6], %s42
      %s44 = sshll.u32 [#allocation7], 4
      %s45 = int_to_ptr.vmem [resolvable:$true] %s44
      %50 = dma.hbm_to_vmem [thread:$0]  %s2, 3072, %s45, [#allocation6], 64, 64, 4
    $region13: #{tpu_custom_call.1} parent=1 // pred_fallthru
      _
    // Predicated region
    $region14: #{tpu_custom_call.1} parent=1 // pred_check
      _
    $region15: #{tpu_custom_call.1} parent=1 // pred_check_branch
      %52 = sbr.rel (0) target = $region17
    $region16: #{tpu_custom_call.1} parent=1 // pred_region
      %s54 = ssub.s32 1024, 1024
      %55 = vsyncadd [#allocation9], %s54
      %s56 = sshll.u32 [#allocation8], 4
      %s57 = int_to_ptr.vmem [resolvable:$true] %s56
      %62 = dma.hbm_to_vmem [thread:$0]  %s3, 1024, %s57, [#allocation9], 64, 64, 4
    $region17: #{tpu_custom_call.1} parent=1 // pred_fallthru
      _
    // Predicated region
    $region18: #{tpu_custom_call.1} parent=1 // pred_check
      _
    $region19: #{tpu_custom_call.1} parent=1 // pred_check_branch
      %64 = sbr.rel (0) target = $region21
    $region20: #{tpu_custom_call.1} parent=1 // pred_region
      _
    $region21: #{tpu_custom_call.1} parent=1 // pred_fallthru
      _
    // Predicated region
    $region22: #{tpu_custom_call.1} parent=1 // pred_check
      _
    $region23: #{tpu_custom_call.1} parent=1 // pred_check_branch
      %66 = sbr.rel (0) target = $region25
    $region24: #{tpu_custom_call.1} parent=1 // pred_region
      _
    $region25: #{tpu_custom_call.1} parent=1 // pred_fallthru
      _
    // Predicated region
    $region26: #{tpu_custom_call.1} parent=1 // pred_check
      _
    $region27: #{tpu_custom_call.1} parent=1 // pred_check_branch
      %68 = sbr.rel (0) target = $region29
    $region28: #{tpu_custom_call.1} parent=1 // pred_region
      %69 = dma.done [#allocation3], 128
    $region29: #{tpu_custom_call.1} parent=1 // pred_fallthru
      _
    // Predicated region
    $region30: #{tpu_custom_call.1} parent=1 // pred_check
      _
    $region31: #{tpu_custom_call.1} parent=1 // pred_check_branch
      %71 = sbr.rel (0) target = $region33
    $region32: #{tpu_custom_call.1} parent=1 // pred_region
      %72 = dma.done [#allocation6], 3072
    $region33: #{tpu_custom_call.1} parent=1 // pred_fallthru
      _
    // Predicated region
    $region34: #{tpu_custom_call.1} parent=1 // pred_check
      _
    $region35: #{tpu_custom_call.1} parent=1 // pred_check_branch
      %74 = sbr.rel (0) target = $region37
    $region36: #{tpu_custom_call.1} parent=1 // pred_region
      %75 = dma.done [#allocation6], 3072
    $region37: #{tpu_custom_call.1} parent=1 // pred_fallthru
      _
    // Predicated region
    $region38: #{tpu_custom_call.1} parent=1 // pred_check
      _
    $region39: #{tpu_custom_call.1} parent=1 // pred_check_branch
      %77 = sbr.rel (0) target = $region41
    $region40: #{tpu_custom_call.1} parent=1 // pred_region
      %78 = dma.done [#allocation9], 1024
    $region41: #{tpu_custom_call.1} parent=1 // pred_fallthru
      _
    %v80 = vld [vmem:[#allocation2] sm:$0xf]
    %v81 = vld [vmem:[#allocation2 + $0x4] sm:$0xf]
    %v82 = vmax.bf16 %v80, 0
    %v83 = vmax.bf16 %v81, 0
    %v84 = vld [vmem:[#allocation5] sm:$0xf]
    %v85 = vld [vmem:[#allocation5 + $0x4] sm:$0xf]
    %v86 = vld [vmem:[#allocation5 + $0x8] sm:$0xf]
    %v87 = vld [vmem:[#allocation5 + $0xc] sm:$0xf]
    %v88 = vld [vmem:[#allocation5 + $0x10] sm:$0xf]
    %v89 = vld [vmem:[#allocation5 + $0x14] sm:$0xf]
    %v90 = vld [vmem:[#allocation5 + $0x18] sm:$0xf]
    %v91 = vld [vmem:[#allocation5 + $0x1c] sm:$0xf]
    %v92 = vld [vmem:[#allocation5 + $0x20] sm:$0xf]
    %v93 = vld [vmem:[#allocation5 + $0x24] sm:$0xf]
    %v94 = vld [vmem:[#allocation5 + $0x28] sm:$0xf]
    %v95 = vld [vmem:[#allocation5 + $0x2c] sm:$0xf]
    %v96 = vld [vmem:[#allocation5 + $0x30] sm:$0xf]
    %v97 = vld [vmem:[#allocation5 + $0x34] sm:$0xf]
    %v98 = vld [vmem:[#allocation5 + $0x38] sm:$0xf]
    %v99 = vld [vmem:[#allocation5 + $0x3c] sm:$0xf]
    %v102 = vunpack.c.l.b16 %v82
    %v103 = vunpack.c.l.b16 %v83
    %v104 = vpack.c.b16 %v103, %v102
    %v122 = vunpack.c.l.b16 %v84
    %v123 = vunpack.c.l.b16 %v85
    %v124 = vunpack.c.l.b16 %v86
    %v125 = vunpack.c.l.b16 %v87
    %v126 = vunpack.c.l.b16 %v88
    %v127 = vunpack.c.l.b16 %v89
    %v128 = vunpack.c.l.b16 %v90
    %v129 = vunpack.c.l.b16 %v91
    %v130 = vunpack.c.l.b16 %v92
    %v131 = vunpack.c.l.b16 %v93
    %v132 = vunpack.c.l.b16 %v94
    %v133 = vunpack.c.l.b16 %v95
    %v134 = vunpack.c.l.b16 %v96
    %v135 = vunpack.c.l.b16 %v97
    %v136 = vunpack.c.l.b16 %v98
    %v137 = vunpack.c.l.b16 %v99
    %v138 = vpack.c.b16 %v123, %v122
    %v139 = vpack.c.b16 %v125, %v124
    %v140 = vpack.c.b16 %v127, %v126
    %v141 = vpack.c.b16 %v129, %v128
    %v142 = vpack.c.b16 %v131, %v130
    %v143 = vpack.c.b16 %v133, %v132
    %v144 = vpack.c.b16 %v135, %v134
    %v145 = vpack.c.b16 %v137, %v136
    %154 = vmatprep.subr.bf16.mxu0 0
    %155 = vmatpush1.bf16.msra.mxu0 %v145
    %156 = vmatprep.subr.bf16.mxu0 0
    %157 = vmatpush1.bf16.msra.mxu0 %v144
    %158 = vmatprep.subr.bf16.mxu0 0
    %159 = vmatpush1.bf16.msra.mxu0 %v143
    %160 = vmatprep.subr.bf16.mxu0 0
    %161 = vmatpush1.bf16.msra.mxu0 %v142
    %162 = vmatprep.subr.bf16.mxu0 0
    %163 = vmatpush1.bf16.msra.mxu0 %v141
    %164 = vmatprep.subr.bf16.mxu0 0
    %165 = vmatpush1.bf16.msra.mxu0 %v140
    %166 = vmatprep.subr.bf16.mxu0 0
    %167 = vmatpush1.bf16.msra.mxu0 %v139
    %168 = vmatprep.subr.bf16.mxu0 0
    %169 = vmatpush1.bf16.msra.mxu0 %v138
    %170 = vmatprep.subr.bf16.mxu0 0
    %171 = vmatpush2.bf16.msra.mxu0 0
    %172 = vmatprep.subr.bf16.mxu0 0
    %173 = vmatpush2.bf16.msra.mxu0 0
    %174 = vmatprep.subr.bf16.mxu0 0
    %175 = vmatpush2.bf16.msra.mxu0 0
    %176 = vmatprep.subr.bf16.mxu0 0
    %177 = vmatpush2.bf16.msra.mxu0 0
    %178 = vmatprep.subr.bf16.mxu0 0
    %179 = vmatpush2.bf16.msra.mxu0 0
    %180 = vmatprep.subr.bf16.mxu0 0
    %181 = vmatpush2.bf16.msra.mxu0 0
    %182 = vmatprep.subr.bf16.mxu0 0
    %183 = vmatpush2.bf16.msra.mxu0 0
    %184 = vmatprep.subr.bf16.mxu0 0
    %185 = vmatpush2.bf16.msra.mxu0 0
    %186 = vmatprep.mubr.bf16.mxu0 0
    %187 = vmatmul.mubr.bf16.gmra.mxu0 %v104
    %v188 = vpop.f32.mrf.mxu0
    %v189 = vadd.f32 0.0, %v188
    %v190 = vpop.f32.mrf.mxu0
    %v191 = vpop.f32.mrf.mxu0
    %v192 = vadd.f32 0.0, %v191
    %v193 = vpop.f32.mrf.mxu0
    %194 = vdwg.mxu0
    %s195 = scalar_lea.vmem [#allocation5], 64
    %v196 = vld [vmem:[%s195] sm:$0xf]
    %v197 = vld [vmem:[%s195 + $0x4] sm:$0xf]
    %v198 = vld [vmem:[%s195 + $0x8] sm:$0xf]
    %v199 = vld [vmem:[%s195 + $0xc] sm:$0xf]
    %v200 = vld [vmem:[%s195 + $0x10] sm:$0xf]
    %v201 = vld [vmem:[%s195 + $0x14] sm:$0xf]
    %v202 = vld [vmem:[%s195 + $0x18] sm:$0xf]
    %v203 = vld [vmem:[%s195 + $0x1c] sm:$0xf]
    %v204 = vld [vmem:[%s195 + $0x20] sm:$0xf]
    %v205 = vld [vmem:[%s195 + $0x24] sm:$0xf]
    %v206 = vld [vmem:[%s195 + $0x28] sm:$0xf]
    %v207 = vld [vmem:[%s195 + $0x2c] sm:$0xf]
    %v208 = vld [vmem:[%s195 + $0x30] sm:$0xf]
    %v209 = vld [vmem:[%s195 + $0x34] sm:$0xf]
    %v210 = vld [vmem:[%s195 + $0x38] sm:$0xf]
    %v211 = vld [vmem:[%s195 + $0x3c] sm:$0xf]
    %v228 = vunpack.c.l.b16 %v196
    %v229 = vunpack.c.l.b16 %v197
    %v230 = vunpack.c.l.b16 %v198
    %v231 = vunpack.c.l.b16 %v199
    %v232 = vunpack.c.l.b16 %v200
    %v233 = vunpack.c.l.b16 %v201
    %v234 = vunpack.c.l.b16 %v202
    %v235 = vunpack.c.l.b16 %v203
    %v236 = vunpack.c.l.b16 %v204
    %v237 = vunpack.c.l.b16 %v205
    %v238 = vunpack.c.l.b16 %v206
    %v239 = vunpack.c.l.b16 %v207
    %v240 = vunpack.c.l.b16 %v208
    %v241 = vunpack.c.l.b16 %v209
    %v242 = vunpack.c.l.b16 %v210
    %v243 = vunpack.c.l.b16 %v211
    %v244 = vpack.c.b16 %v229, %v228
    %v245 = vpack.c.b16 %v231, %v230
    %v246 = vpack.c.b16 %v233, %v232
    %v247 = vpack.c.b16 %v235, %v234
    %v248 = vpack.c.b16 %v237, %v236
    %v249 = vpack.c.b16 %v239, %v238
    %v250 = vpack.c.b16 %v241, %v240
    %v251 = vpack.c.b16 %v243, %v242
    %260 = vmatprep.subr.bf16.mxu0 0
    %261 = vmatpush1.bf16.msra.mxu0 %v251
    %262 = vmatprep.subr.bf16.mxu0 0
    %263 = vmatpush1.bf16.msra.mxu0 %v250
    %264 = vmatprep.subr.bf16.mxu0 0
    %265 = vmatpush1.bf16.msra.mxu0 %v249
    %266 = vmatprep.subr.bf16.mxu0 0
    %267 = vmatpush1.bf16.msra.mxu0 %v248
    %268 = vmatprep.subr.bf16.mxu0 0
    %269 = vmatpush1.bf16.msra.mxu0 %v247
    %270 = vmatprep.subr.bf16.mxu0 0
    %271 = vmatpush1.bf16.msra.mxu0 %v246
    %272 = vmatprep.subr.bf16.mxu0 0
    %273 = vmatpush1.bf16.msra.mxu0 %v245
    %274 = vmatprep.subr.bf16.mxu0 0
    %275 = vmatpush1.bf16.msra.mxu0 %v244
    %276 = vmatprep.subr.bf16.mxu0 0
    %277 = vmatpush2.bf16.msra.mxu0 0
    %278 = vmatprep.subr.bf16.mxu0 0
    %279 = vmatpush2.bf16.msra.mxu0 0
    %280 = vmatprep.subr.bf16.mxu0 0
    %281 = vmatpush2.bf16.msra.mxu0 0
    %282 = vmatprep.subr.bf16.mxu0 0
    %283 = vmatpush2.bf16.msra.mxu0 0
    %284 = vmatprep.subr.bf16.mxu0 0
    %285 = vmatpush2.bf16.msra.mxu0 0
    %286 = vmatprep.subr.bf16.mxu0 0
    %287 = vmatpush2.bf16.msra.mxu0 0
    %288 = vmatprep.subr.bf16.mxu0 0
    %289 = vmatpush2.bf16.msra.mxu0 0
    %290 = vmatprep.subr.bf16.mxu0 0
    %291 = vmatpush2.bf16.msra.mxu0 0
    %292 = vmatprep.mubr.bf16.mxu0 0
    %293 = vmatmul.mubr.bf16.gmra.mxu0 %v104
    %v294 = vpop.f32.mrf.mxu0
    %v295 = vadd.f32 0.0, %v294
    %v296 = vpop.f32.mrf.mxu0
    %v297 = vpop.f32.mrf.mxu0
    %v298 = vadd.f32 0.0, %v297
    %v299 = vpop.f32.mrf.mxu0
    %300 = vdwg.mxu0
    %s301 = scalar_lea.vmem [#allocation5], 128
    %v302 = vld [vmem:[%s301] sm:$0xf]
    %v303 = vld [vmem:[%s301 + $0x4] sm:$0xf]
    %v304 = vld [vmem:[%s301 + $0x8] sm:$0xf]
    %v305 = vld [vmem:[%s301 + $0xc] sm:$0xf]
    %v306 = vld [vmem:[%s301 + $0x10] sm:$0xf]
    %v307 = vld [vmem:[%s301 + $0x14] sm:$0xf]
    %v308 = vld [vmem:[%s301 + $0x18] sm:$0xf]
    %v309 = vld [vmem:[%s301 + $0x1c] sm:$0xf]
    %v310 = vld [vmem:[%s301 + $0x20] sm:$0xf]
    %v311 = vld [vmem:[%s301 + $0x24] sm:$0xf]
    %v312 = vld [vmem:[%s301 + $0x28] sm:$0xf]
    %v313 = vld [vmem:[%s301 + $0x2c] sm:$0xf]
    %v314 = vld [vmem:[%s301 + $0x30] sm:$0xf]
    %v315 = vld [vmem:[%s301 + $0x34] sm:$0xf]
    %v316 = vld [vmem:[%s301 + $0x38] sm:$0xf]
    %v317 = vld [vmem:[%s301 + $0x3c] sm:$0xf]
    %v334 = vunpack.c.l.b16 %v302
    %v335 = vunpack.c.l.b16 %v303
    %v336 = vunpack.c.l.b16 %v304
    %v337 = vunpack.c.l.b16 %v305
    %v338 = vunpack.c.l.b16 %v306
    %v339 = vunpack.c.l.b16 %v307
    %v340 = vunpack.c.l.b16 %v308
    %v341 = vunpack.c.l.b16 %v309
    %v342 = vunpack.c.l.b16 %v310
    %v343 = vunpack.c.l.b16 %v311
    %v344 = vunpack.c.l.b16 %v312
    %v345 = vunpack.c.l.b16 %v313
    %v346 = vunpack.c.l.b16 %v314
    %v347 = vunpack.c.l.b16 %v315
    %v348 = vunpack.c.l.b16 %v316
    %v349 = vunpack.c.l.b16 %v317
    %v350 = vpack.c.b16 %v335, %v334
    %v351 = vpack.c.b16 %v337, %v336
    %v352 = vpack.c.b16 %v339, %v338
    %v353 = vpack.c.b16 %v341, %v340
    %v354 = vpack.c.b16 %v343, %v342
    %v355 = vpack.c.b16 %v345, %v344
    %v356 = vpack.c.b16 %v347, %v346
    %v357 = vpack.c.b16 %v349, %v348
    %366 = vmatprep.subr.bf16.mxu0 0
    %367 = vmatpush1.bf16.msra.mxu0 %v357
    %368 = vmatprep.subr.bf16.mxu0 0
    %369 = vmatpush1.bf16.msra.mxu0 %v356
    %370 = vmatprep.subr.bf16.mxu0 0
    %371 = vmatpush1.bf16.msra.mxu0 %v355
    %372 = vmatprep.subr.bf16.mxu0 0
    %373 = vmatpush1.bf16.msra.mxu0 %v354
    %374 = vmatprep.subr.bf16.mxu0 0
    %375 = vmatpush1.bf16.msra.mxu0 %v353
    %376 = vmatprep.subr.bf16.mxu0 0
    %377 = vmatpush1.bf16.msra.mxu0 %v352
    %378 = vmatprep.subr.bf16.mxu0 0
    %379 = vmatpush1.bf16.msra.mxu0 %v351
    %380 = vmatprep.subr.bf16.mxu0 0
    %381 = vmatpush1.bf16.msra.mxu0 %v350
    %382 = vmatprep.subr.bf16.mxu0 0
    %383 = vmatpush2.bf16.msra.mxu0 0
    %384 = vmatprep.subr.bf16.mxu0 0
    %385 = vmatpush2.bf16.msra.mxu0 0
    %386 = vmatprep.subr.bf16.mxu0 0
    %387 = vmatpush2.bf16.msra.mxu0 0
    %388 = vmatprep.subr.bf16.mxu0 0
    %389 = vmatpush2.bf16.msra.mxu0 0
    %390 = vmatprep.subr.bf16.mxu0 0
    %391 = vmatpush2.bf16.msra.mxu0 0
    %392 = vmatprep.subr.bf16.mxu0 0
    %393 = vmatpush2.bf16.msra.mxu0 0
    %394 = vmatprep.subr.bf16.mxu0 0
    %395 = vmatpush2.bf16.msra.mxu0 0
    %396 = vmatprep.subr.bf16.mxu0 0
    %397 = vmatpush2.bf16.msra.mxu0 0
    %398 = vmatprep.mubr.bf16.mxu0 0
    %399 = vmatmul.mubr.bf16.gmra.mxu0 %v104
    %v400 = vpop.f32.mrf.mxu0
    %v401 = vadd.f32 0.0, %v400
    %v402 = vpop.f32.mrf.mxu0
    %v403 = vpop.f32.mrf.mxu0
    %v404 = vadd.f32 0.0, %v403
    %v405 = vpop.f32.mrf.mxu0
    %406 = vdwg.mxu0
    %vm409 = vcmask 1040384
    %v410 = vrot.slane %v189, 7
    %v411 = vrot.slane %v192, 7
    %v412 = vsel %vm409, %v410, %v411
    %v415 = vsel %vm409, 0.0, %v410
    %v416 = vadd.f32 %v295, %v415
    %v417 = vadd.f32 %v298, %v412
    %vm420 = vcmask 1046528
    %v421 = vrot.slane %v401, 1
    %v422 = vrot.slane %v404, 1
    %v423 = vsel %vm420, %v421, %v422
    %v426 = vsel %vm420, %v422, 0.0
    %v427 = vadd.f32 %v416, %v423
    %v428 = vadd.f32 %v417, %v426
    %v429 = vld [vmem:[%s4] sm:$0x1]
    %v431 = vlaneseq
    %v432 = vshrl.u32 %v431, 7
    %v433 = vsub.s32 0, %v432
    %v434 = vrot.slane %v429, %v433
    %v436 = vadd.f32 %v427, %v434
    %v437 = vadd.f32 %v428, %v434
    %v438 = vmax.f32 %v436, 0.0
    %v439 = vmax.f32 %v437, 0.0
    %v440 = vpack.c.bf16 %v439, %v438
    %v441 = vld [vmem:[#allocation7] sm:$0xf]
    %v442 = vld [vmem:[#allocation7 + $0x4] sm:$0xf]
    %v443 = vld [vmem:[#allocation7 + $0x8] sm:$0xf]
    %v444 = vld [vmem:[#allocation7 + $0xc] sm:$0xf]
    %v445 = vld [vmem:[#allocation7 + $0x10] sm:$0xf]
    %v446 = vld [vmem:[#allocation7 + $0x14] sm:$0xf]
    %v447 = vld [vmem:[#allocation7 + $0x18] sm:$0xf]
    %v448 = vld [vmem:[#allocation7 + $0x1c] sm:$0xf]
    %v449 = vld [vmem:[#allocation7 + $0x20] sm:$0xf]
    %v450 = vld [vmem:[#allocation7 + $0x24] sm:$0xf]
    %v451 = vld [vmem:[#allocation7 + $0x28] sm:$0xf]
    %v452 = vld [vmem:[#allocation7 + $0x2c] sm:$0xf]
    %v453 = vld [vmem:[#allocation7 + $0x30] sm:$0xf]
    %v454 = vld [vmem:[#allocation7 + $0x34] sm:$0xf]
    %v455 = vld [vmem:[#allocation7 + $0x38] sm:$0xf]
    %v456 = vld [vmem:[#allocation7 + $0x3c] sm:$0xf]
    %v473 = vunpack.c.l.b16 %v441
    %v474 = vunpack.c.l.b16 %v442
    %v475 = vunpack.c.l.b16 %v443
    %v476 = vunpack.c.l.b16 %v444
    %v477 = vunpack.c.l.b16 %v445
    %v478 = vunpack.c.l.b16 %v446
    %v479 = vunpack.c.l.b16 %v447
    %v480 = vunpack.c.l.b16 %v448
    %v481 = vunpack.c.l.b16 %v449
    %v482 = vunpack.c.l.b16 %v450
    %v483 = vunpack.c.l.b16 %v451
    %v484 = vunpack.c.l.b16 %v452
    %v485 = vunpack.c.l.b16 %v453
    %v486 = vunpack.c.l.b16 %v454
    %v487 = vunpack.c.l.b16 %v455
    %v488 = vunpack.c.l.b16 %v456
    %v489 = vpack.c.b16 %v474, %v473
    %v490 = vpack.c.b16 %v476, %v475
    %v491 = vpack.c.b16 %v478, %v477
    %v492 = vpack.c.b16 %v480, %v479
    %v493 = vpack.c.b16 %v482, %v481
    %v494 = vpack.c.b16 %v484, %v483
    %v495 = vpack.c.b16 %v486, %v485
    %v496 = vpack.c.b16 %v488, %v487
    %505 = vmatprep.subr.bf16.mxu0 0
    %506 = vmatpush1.bf16.msra.mxu0 %v496
    %507 = vmatprep.subr.bf16.mxu0 0
    %508 = vmatpush1.bf16.msra.mxu0 %v495
    %509 = vmatprep.subr.bf16.mxu0 0
    %510 = vmatpush1.bf16.msra.mxu0 %v494
    %511 = vmatprep.subr.bf16.mxu0 0
    %512 = vmatpush1.bf16.msra.mxu0 %v493
    %513 = vmatprep.subr.bf16.mxu0 0
    %514 = vmatpush1.bf16.msra.mxu0 %v492
    %515 = vmatprep.subr.bf16.mxu0 0
    %516 = vmatpush1.bf16.msra.mxu0 %v491
    %517 = vmatprep.subr.bf16.mxu0 0
    %518 = vmatpush1.bf16.msra.mxu0 %v490
    %519 = vmatprep.subr.bf16.mxu0 0
    %520 = vmatpush1.bf16.msra.mxu0 %v489
    %521 = vmatprep.subr.bf16.mxu0 0
    %522 = vmatpush2.bf16.msra.mxu0 0
    %523 = vmatprep.subr.bf16.mxu0 0
    %524 = vmatpush2.bf16.msra.mxu0 0
    %525 = vmatprep.subr.bf16.mxu0 0
    %526 = vmatpush2.bf16.msra.mxu0 0
    %527 = vmatprep.subr.bf16.mxu0 0
    %528 = vmatpush2.bf16.msra.mxu0 0
    %529 = vmatprep.subr.bf16.mxu0 0
    %530 = vmatpush2.bf16.msra.mxu0 0
    %531 = vmatprep.subr.bf16.mxu0 0
    %532 = vmatpush2.bf16.msra.mxu0 0
    %533 = vmatprep.subr.bf16.mxu0 0
    %534 = vmatpush2.bf16.msra.mxu0 0
    %535 = vmatprep.subr.bf16.mxu0 0
    %536 = vmatpush2.bf16.msra.mxu0 0
    %537 = vmatprep.mubr.bf16.mxu0 0
    %538 = vmatmul.mubr.bf16.gmra.mxu0 %v440
    %v539 = vpop.f32.mrf.mxu0
    %v540 = vadd.f32 0.0, %v539
    %v541 = vpop.f32.mrf.mxu0
    %v542 = vpop.f32.mrf.mxu0
    %v543 = vadd.f32 0.0, %v542
    %v544 = vpop.f32.mrf.mxu0
    %545 = vdwg.mxu0
    %s546 = scalar_lea.vmem [#allocation7], 64
    %v547 = vld [vmem:[%s546] sm:$0xf]
    %v548 = vld [vmem:[%s546 + $0x4] sm:$0xf]
    %v549 = vld [vmem:[%s546 + $0x8] sm:$0xf]
    %v550 = vld [vmem:[%s546 + $0xc] sm:$0xf]
    %v551 = vld [vmem:[%s546 + $0x10] sm:$0xf]
    %v552 = vld [vmem:[%s546 + $0x14] sm:$0xf]
    %v553 = vld [vmem:[%s546 + $0x18] sm:$0xf]
    %v554 = vld [vmem:[%s546 + $0x1c] sm:$0xf]
    %v555 = vld [vmem:[%s546 + $0x20] sm:$0xf]
    %v556 = vld [vmem:[%s546 + $0x24] sm:$0xf]
    %v557 = vld [vmem:[%s546 + $0x28] sm:$0xf]
    %v558 = vld [vmem:[%s546 + $0x2c] sm:$0xf]
    %v559 = vld [vmem:[%s546 + $0x30] sm:$0xf]
    %v560 = vld [vmem:[%s546 + $0x34] sm:$0xf]
    %v561 = vld [vmem:[%s546 + $0x38] sm:$0xf]
    %v562 = vld [vmem:[%s546 + $0x3c] sm:$0xf]
    %v579 = vunpack.c.l.b16 %v547
    %v580 = vunpack.c.l.b16 %v548
    %v581 = vunpack.c.l.b16 %v549
    %v582 = vunpack.c.l.b16 %v550
    %v583 = vunpack.c.l.b16 %v551
    %v584 = vunpack.c.l.b16 %v552
    %v585 = vunpack.c.l.b16 %v553
    %v586 = vunpack.c.l.b16 %v554
    %v587 = vunpack.c.l.b16 %v555
    %v588 = vunpack.c.l.b16 %v556
    %v589 = vunpack.c.l.b16 %v557
    %v590 = vunpack.c.l.b16 %v558
    %v591 = vunpack.c.l.b16 %v559
    %v592 = vunpack.c.l.b16 %v560
    %v593 = vunpack.c.l.b16 %v561
    %v594 = vunpack.c.l.b16 %v562
    %v595 = vpack.c.b16 %v580, %v579
    %v596 = vpack.c.b16 %v582, %v581
    %v597 = vpack.c.b16 %v584, %v583
    %v598 = vpack.c.b16 %v586, %v585
    %v599 = vpack.c.b16 %v588, %v587
    %v600 = vpack.c.b16 %v590, %v589
    %v601 = vpack.c.b16 %v592, %v591
    %v602 = vpack.c.b16 %v594, %v593
    %611 = vmatprep.subr.bf16.mxu0 0
    %612 = vmatpush1.bf16.msra.mxu0 %v602
    %613 = vmatprep.subr.bf16.mxu0 0
    %614 = vmatpush1.bf16.msra.mxu0 %v601
    %615 = vmatprep.subr.bf16.mxu0 0
    %616 = vmatpush1.bf16.msra.mxu0 %v600
    %617 = vmatprep.subr.bf16.mxu0 0
    %618 = vmatpush1.bf16.msra.mxu0 %v599
    %619 = vmatprep.subr.bf16.mxu0 0
    %620 = vmatpush1.bf16.msra.mxu0 %v598
    %621 = vmatprep.subr.bf16.mxu0 0
    %622 = vmatpush1.bf16.msra.mxu0 %v597
    %623 = vmatprep.subr.bf16.mxu0 0
    %624 = vmatpush1.bf16.msra.mxu0 %v596
    %625 = vmatprep.subr.bf16.mxu0 0
    %626 = vmatpush1.bf16.msra.mxu0 %v595
    %627 = vmatprep.subr.bf16.mxu0 0
    %628 = vmatpush2.bf16.msra.mxu0 0
    %629 = vmatprep.subr.bf16.mxu0 0
    %630 = vmatpush2.bf16.msra.mxu0 0
    %631 = vmatprep.subr.bf16.mxu0 0
    %632 = vmatpush2.bf16.msra.mxu0 0
    %633 = vmatprep.subr.bf16.mxu0 0
    %634 = vmatpush2.bf16.msra.mxu0 0
    %635 = vmatprep.subr.bf16.mxu0 0
    %636 = vmatpush2.bf16.msra.mxu0 0
    %637 = vmatprep.subr.bf16.mxu0 0
    %638 = vmatpush2.bf16.msra.mxu0 0
    %639 = vmatprep.subr.bf16.mxu0 0
    %640 = vmatpush2.bf16.msra.mxu0 0
    %641 = vmatprep.subr.bf16.mxu0 0
    %642 = vmatpush2.bf16.msra.mxu0 0
    %643 = vmatprep.mubr.bf16.mxu0 0
    %644 = vmatmul.mubr.bf16.gmra.mxu0 %v440
    %v645 = vpop.f32.mrf.mxu0
    %v646 = vadd.f32 0.0, %v645
    %v647 = vpop.f32.mrf.mxu0
    %v648 = vpop.f32.mrf.mxu0
    %v649 = vadd.f32 0.0, %v648
    %v650 = vpop.f32.mrf.mxu0
    %651 = vdwg.mxu0
    %s652 = scalar_lea.vmem [#allocation7], 128
    %v653 = vld [vmem:[%s652] sm:$0xf]
    %v654 = vld [vmem:[%s652 + $0x4] sm:$0xf]
    %v655 = vld [vmem:[%s652 + $0x8] sm:$0xf]
    %v656 = vld [vmem:[%s652 + $0xc] sm:$0xf]
    %v657 = vld [vmem:[%s652 + $0x10] sm:$0xf]
    %v658 = vld [vmem:[%s652 + $0x14] sm:$0xf]
    %v659 = vld [vmem:[%s652 + $0x18] sm:$0xf]
    %v660 = vld [vmem:[%s652 + $0x1c] sm:$0xf]
    %v661 = vld [vmem:[%s652 + $0x20] sm:$0xf]
    %v662 = vld [vmem:[%s652 + $0x24] sm:$0xf]
    %v663 = vld [vmem:[%s652 + $0x28] sm:$0xf]
    %v664 = vld [vmem:[%s652 + $0x2c] sm:$0xf]
    %v665 = vld [vmem:[%s652 + $0x30] sm:$0xf]
    %v666 = vld [vmem:[%s652 + $0x34] sm:$0xf]
    %v667 = vld [vmem:[%s652 + $0x38] sm:$0xf]
    %v668 = vld [vmem:[%s652 + $0x3c] sm:$0xf]
    %v685 = vunpack.c.l.b16 %v653
    %v686 = vunpack.c.l.b16 %v654
    %v687 = vunpack.c.l.b16 %v655
    %v688 = vunpack.c.l.b16 %v656
    %v689 = vunpack.c.l.b16 %v657
    %v690 = vunpack.c.l.b16 %v658
    %v691 = vunpack.c.l.b16 %v659
    %v692 = vunpack.c.l.b16 %v660
    %v693 = vunpack.c.l.b16 %v661
    %v694 = vunpack.c.l.b16 %v662
    %v695 = vunpack.c.l.b16 %v663
    %v696 = vunpack.c.l.b16 %v664
    %v697 = vunpack.c.l.b16 %v665
    %v698 = vunpack.c.l.b16 %v666
    %v699 = vunpack.c.l.b16 %v667
    %v700 = vunpack.c.l.b16 %v668
    %v701 = vpack.c.b16 %v686, %v685
    %v702 = vpack.c.b16 %v688, %v687
    %v703 = vpack.c.b16 %v690, %v689
    %v704 = vpack.c.b16 %v692, %v691
    %v705 = vpack.c.b16 %v694, %v693
    %v706 = vpack.c.b16 %v696, %v695
    %v707 = vpack.c.b16 %v698, %v697
    %v708 = vpack.c.b16 %v700, %v699
    %717 = vmatprep.subr.bf16.mxu0 0
    %718 = vmatpush1.bf16.msra.mxu0 %v708
    %719 = vmatprep.subr.bf16.mxu0 0
    %720 = vmatpush1.bf16.msra.mxu0 %v707
    %721 = vmatprep.subr.bf16.mxu0 0
    %722 = vmatpush1.bf16.msra.mxu0 %v706
    %723 = vmatprep.subr.bf16.mxu0 0
    %724 = vmatpush1.bf16.msra.mxu0 %v705
    %725 = vmatprep.subr.bf16.mxu0 0
    %726 = vmatpush1.bf16.msra.mxu0 %v704
    %727 = vmatprep.subr.bf16.mxu0 0
    %728 = vmatpush1.bf16.msra.mxu0 %v703
    %729 = vmatprep.subr.bf16.mxu0 0
    %730 = vmatpush1.bf16.msra.mxu0 %v702
    %731 = vmatprep.subr.bf16.mxu0 0
    %732 = vmatpush1.bf16.msra.mxu0 %v701
    %733 = vmatprep.subr.bf16.mxu0 0
    %734 = vmatpush2.bf16.msra.mxu0 0
    %735 = vmatprep.subr.bf16.mxu0 0
    %736 = vmatpush2.bf16.msra.mxu0 0
    %737 = vmatprep.subr.bf16.mxu0 0
    %738 = vmatpush2.bf16.msra.mxu0 0
    %739 = vmatprep.subr.bf16.mxu0 0
    %740 = vmatpush2.bf16.msra.mxu0 0
    %741 = vmatprep.subr.bf16.mxu0 0
    %742 = vmatpush2.bf16.msra.mxu0 0
    %743 = vmatprep.subr.bf16.mxu0 0
    %744 = vmatpush2.bf16.msra.mxu0 0
    %745 = vmatprep.subr.bf16.mxu0 0
    %746 = vmatpush2.bf16.msra.mxu0 0
    %747 = vmatprep.subr.bf16.mxu0 0
    %748 = vmatpush2.bf16.msra.mxu0 0
    %749 = vmatprep.mubr.bf16.mxu0 0
    %750 = vmatmul.mubr.bf16.gmra.mxu0 %v440
    %v751 = vpop.f32.mrf.mxu0
    %v752 = vadd.f32 0.0, %v751
    %v753 = vpop.f32.mrf.mxu0
    %v754 = vpop.f32.mrf.mxu0
    %v755 = vadd.f32 0.0, %v754
    %v756 = vpop.f32.mrf.mxu0
    %757 = vdwg.mxu0
    %v760 = vrot.slane %v540, 7
    %v761 = vrot.slane %v543, 7
    %v762 = vsel %vm409, %v760, %v761
    %v765 = vsel %vm409, 0.0, %v760
    %v766 = vadd.f32 %v646, %v765
    %v767 = vadd.f32 %v649, %v762
    %v770 = vrot.slane %v752, 1
    %v771 = vrot.slane %v755, 1
    %v772 = vsel %vm420, %v770, %v771
    %v775 = vsel %vm420, %v771, 0.0
    %v776 = vadd.f32 %v766, %v772
    %v777 = vadd.f32 %v767, %v775
    %v778 = vld [vmem:[#allocation8] sm:$0xf]
    %v779 = vld [vmem:[#allocation8 + $0x4] sm:$0xf]
    %v780 = vld [vmem:[#allocation8 + $0x8] sm:$0xf]
    %v781 = vld [vmem:[#allocation8 + $0xc] sm:$0xf]
    %v782 = vld [vmem:[#allocation8 + $0x10] sm:$0xf]
    %v783 = vld [vmem:[#allocation8 + $0x14] sm:$0xf]
    %v784 = vld [vmem:[#allocation8 + $0x18] sm:$0xf]
    %v785 = vld [vmem:[#allocation8 + $0x1c] sm:$0xf]
    %v786 = vld [vmem:[#allocation8 + $0x20] sm:$0xf]
    %v787 = vld [vmem:[#allocation8 + $0x24] sm:$0xf]
    %v788 = vld [vmem:[#allocation8 + $0x28] sm:$0xf]
    %v789 = vld [vmem:[#allocation8 + $0x2c] sm:$0xf]
    %v790 = vld [vmem:[#allocation8 + $0x30] sm:$0xf]
    %v791 = vld [vmem:[#allocation8 + $0x34] sm:$0xf]
    %v792 = vld [vmem:[#allocation8 + $0x38] sm:$0xf]
    %v793 = vld [vmem:[#allocation8 + $0x3c] sm:$0xf]
    %v796 = vunpack.c.l.b16 %v80
    %v797 = vunpack.c.l.b16 %v81
    %v798 = vpack.c.b16 %v797, %v796
    %v816 = vunpack.c.l.b16 %v778
    %v817 = vunpack.c.l.b16 %v779
    %v818 = vunpack.c.l.b16 %v780
    %v819 = vunpack.c.l.b16 %v781
    %v820 = vunpack.c.l.b16 %v782
    %v821 = vunpack.c.l.b16 %v783
    %v822 = vunpack.c.l.b16 %v784
    %v823 = vunpack.c.l.b16 %v785
    %v824 = vunpack.c.l.b16 %v786
    %v825 = vunpack.c.l.b16 %v787
    %v826 = vunpack.c.l.b16 %v788
    %v827 = vunpack.c.l.b16 %v789
    %v828 = vunpack.c.l.b16 %v790
    %v829 = vunpack.c.l.b16 %v791
    %v830 = vunpack.c.l.b16 %v792
    %v831 = vunpack.c.l.b16 %v793
    %v832 = vpack.c.b16 %v817, %v816
    %v833 = vpack.c.b16 %v819, %v818
    %v834 = vpack.c.b16 %v821, %v820
    %v835 = vpack.c.b16 %v823, %v822
    %v836 = vpack.c.b16 %v825, %v824
    %v837 = vpack.c.b16 %v827, %v826
    %v838 = vpack.c.b16 %v829, %v828
    %v839 = vpack.c.b16 %v831, %v830
    %848 = vmatprep.subr.bf16.mxu0 0
    %849 = vmatpush1.bf16.msra.mxu0 %v839
    %850 = vmatprep.subr.bf16.mxu0 0
    %851 = vmatpush1.bf16.msra.mxu0 %v838
    %852 = vmatprep.subr.bf16.mxu0 0
    %853 = vmatpush1.bf16.msra.mxu0 %v837
    %854 = vmatprep.subr.bf16.mxu0 0
    %855 = vmatpush1.bf16.msra.mxu0 %v836
    %856 = vmatprep.subr.bf16.mxu0 0
    %857 = vmatpush1.bf16.msra.mxu0 %v835
    %858 = vmatprep.subr.bf16.mxu0 0
    %859 = vmatpush1.bf16.msra.mxu0 %v834
    %860 = vmatprep.subr.bf16.mxu0 0
    %861 = vmatpush1.bf16.msra.mxu0 %v833
    %862 = vmatprep.subr.bf16.mxu0 0
    %863 = vmatpush1.bf16.msra.mxu0 %v832
    %864 = vmatprep.subr.bf16.mxu0 0
    %865 = vmatpush2.bf16.msra.mxu0 0
    %866 = vmatprep.subr.bf16.mxu0 0
    %867 = vmatpush2.bf16.msra.mxu0 0
    %868 = vmatprep.subr.bf16.mxu0 0
    %869 = vmatpush2.bf16.msra.mxu0 0
    %870 = vmatprep.subr.bf16.mxu0 0
    %871 = vmatpush2.bf16.msra.mxu0 0
    %872 = vmatprep.subr.bf16.mxu0 0
    %873 = vmatpush2.bf16.msra.mxu0 0
    %874 = vmatprep.subr.bf16.mxu0 0
    %875 = vmatpush2.bf16.msra.mxu0 0
    %876 = vmatprep.subr.bf16.mxu0 0
    %877 = vmatpush2.bf16.msra.mxu0 0
    %878 = vmatprep.subr.bf16.mxu0 0
    %879 = vmatpush2.bf16.msra.mxu0 0
    %880 = vmatprep.mubr.bf16.mxu0 0
    %881 = vmatmul.mubr.bf16.gmra.mxu0 %v798
    %v882 = vpop.f32.mrf.mxu0
    %v883 = vadd.f32 0.0, %v882
    %v884 = vpop.f32.mrf.mxu0
    %v885 = vpop.f32.mrf.mxu0
    %v886 = vadd.f32 0.0, %v885
    %v887 = vpop.f32.mrf.mxu0
    %888 = vdwg.mxu0
    %v889 = vadd.f32 %v776, %v883
    %v890 = vadd.f32 %v777, %v886
    %v893 = vcombine.high %v889, %v889
    %v895 = vunpack.c.l.s4 1983009808
    %v896 = vunpack.c.0.s8 %v895
    %v897 = vlaneseq
    %v898 = vshrl.u32 %v897, 7
    %v899 = vsub.s32 %v896, %v898
    %v900 = vrot.slane %v889, %v899
    %v902 = vunpack.c.l.s4 1983009808
    %v903 = vunpack.c.0.s8 %v902
    %v904 = vlaneseq
    %v905 = vshrl.u32 %v904, 7
    %v906 = vsub.s32 %v903, %v905
    %v907 = vrot.slane %v893, %v906
    %v908 = vcombine.high %v900, %v900
    %v909 = vcombine.high %v907, %v907
    %v910 = vcombine.high %v890, %v890
    %v912 = vunpack.c.l.s4 1983009808
    %v913 = vunpack.c.0.s8 %v912
    %v914 = vlaneseq
    %v915 = vshrl.u32 %v914, 7
    %v916 = vsub.s32 %v913, %v915
    %v917 = vrot.slane %v890, %v916
    %v919 = vunpack.c.l.s4 1983009808
    %v920 = vunpack.c.0.s8 %v919
    %v921 = vlaneseq
    %v922 = vshrl.u32 %v921, 7
    %v923 = vsub.s32 %v920, %v922
    %v924 = vrot.slane %v910, %v923
    %v925 = vcombine.high %v917, %v917
    %v926 = vcombine.high %v924, %v924
    %v935 = vrot.slane %v900, 7
    %v936 = vrot.slane %v935, 2
    %v937 = vrot.slane %v908, 7
    %v938 = vrot.slane %v937, 2
    %v939 = vrot.slane %v907, 7
    %v940 = vrot.slane %v939, 2
    %v941 = vrot.slane %v909, 7
    %v942 = vrot.slane %v941, 2
    %v943 = vrot.slane %v917, 7
    %v944 = vrot.slane %v943, 2
    %v945 = vrot.slane %v925, 7
    %v946 = vrot.slane %v945, 2
    %v947 = vrot.slane %v924, 7
    %v948 = vrot.slane %v947, 2
    %v949 = vrot.slane %v926, 7
    %v950 = vrot.slane %v949, 2
    %v959 = vadd.f32 %v900, %v936
    %v960 = vadd.f32 %v908, %v938
    %v961 = vadd.f32 %v907, %v940
    %v962 = vadd.f32 %v909, %v942
    %v963 = vadd.f32 %v917, %v944
    %v964 = vadd.f32 %v925, %v946
    %v965 = vadd.f32 %v924, %v948
    %v966 = vadd.f32 %v926, %v950
    %v967 = vmul.f32 %v959, 0.25
    %v968 = vmul.f32 %v960, 0.25
    %v969 = vmul.f32 %v961, 0.25
    %v970 = vmul.f32 %v962, 0.25
    %v971 = vmul.f32 %v963, 0.25
    %v972 = vmul.f32 %v964, 0.25
    %v973 = vmul.f32 %v965, 0.25
    %v974 = vmul.f32 %v966, 0.25
    %v975 = vld [vmem:[%s5] sm:$0x1]
    %v977 = vlaneseq
    %v978 = vshrl.u32 %v977, 7
    %v979 = vsub.s32 0, %v978
    %v980 = vrot.slane %v975, %v979
    %v981 = vcombine.high %v980, %v980
    %v983 = vunpack.c.l.s4 1983009808
    %v984 = vunpack.c.0.s8 %v983
    %v985 = vlaneseq
    %v986 = vshrl.u32 %v985, 7
    %v987 = vsub.s32 %v984, %v986
    %v988 = vrot.slane %v980, %v987
    %v990 = vunpack.c.l.s4 1983009808
    %v991 = vunpack.c.0.s8 %v990
    %v992 = vlaneseq
    %v993 = vshrl.u32 %v992, 7
    %v994 = vsub.s32 %v991, %v993
    %v995 = vrot.slane %v981, %v994
    %v996 = vcombine.high %v988, %v988
    %v997 = vcombine.high %v995, %v995
    %v998 = vrot.slane %v988, 1
    %v999 = vrot.slane %v996, 1
    %v1000 = vrot.slane %v995, 1
    %v1001 = vrot.slane %v997, 1
    %v1010 = vadd.f32 %v967, %v988
    %v1011 = vadd.f32 %v968, %v998
    %v1012 = vadd.f32 %v969, %v996
    %v1013 = vadd.f32 %v970, %v999
    %v1014 = vadd.f32 %v971, %v995
    %v1015 = vadd.f32 %v972, %v1000
    %v1016 = vadd.f32 %v973, %v997
    %v1017 = vadd.f32 %v974, %v1001
    %v1026 = vlaneseq
    %v1027 = vshrl.u32 %v1026, 7
    %v1028 = vsub.s32 0, %v1027
    %v1029 = vrot.slane %v1010, %v1028
    %v1030 = vlaneseq
    %v1031 = vshrl.u32 %v1030, 7
    %v1032 = vsub.s32 0, %v1031
    %v1033 = vrot.slane %v1011, %v1032
    %v1034 = vlaneseq
    %v1035 = vshrl.u32 %v1034, 7
    %v1036 = vsub.s32 0, %v1035
    %v1037 = vrot.slane %v1012, %v1036
    %v1038 = vlaneseq
    %v1039 = vshrl.u32 %v1038, 7
    %v1040 = vsub.s32 0, %v1039
    %v1041 = vrot.slane %v1013, %v1040
    %v1042 = vlaneseq
    %v1043 = vshrl.u32 %v1042, 7
    %v1044 = vsub.s32 0, %v1043
    %v1045 = vrot.slane %v1014, %v1044
    %v1046 = vlaneseq
    %v1047 = vshrl.u32 %v1046, 7
    %v1048 = vsub.s32 0, %v1047
    %v1049 = vrot.slane %v1015, %v1048
    %v1050 = vlaneseq
    %v1051 = vshrl.u32 %v1050, 7
    %v1052 = vsub.s32 0, %v1051
    %v1053 = vrot.slane %v1016, %v1052
    %v1054 = vlaneseq
    %v1055 = vshrl.u32 %v1054, 7
    %v1056 = vsub.s32 0, %v1055
    %v1057 = vrot.slane %v1017, %v1056
    %vm1058 = vcmask 1041409
    %v1059 = vsel %vm1058, %v1033, %v1029
    %vm1060 = vcmask 1042434
    %v1061 = vsel %vm1060, %v1037, %v1059
    %vm1062 = vcmask 1043459
    %v1063 = vsel %vm1062, %v1041, %v1061
    %vm1064 = vcmask 1044484
    %v1065 = vsel %vm1064, %v1045, %v1063
    %vm1066 = vcmask 1045509
    %v1067 = vsel %vm1066, %v1049, %v1065
    %vm1068 = vcmask 1046534
    %v1069 = vsel %vm1068, %v1053, %v1067
    %vm1070 = vcmask 1047559
    %v1071 = vsel %vm1070, %v1057, %v1069
    %1073 = vst [vmem:[#allocation10] sm:$0xff] %v1071
    // Predicated region
    $region42: #{tpu_custom_call.1} parent=1 // pred_check
      _
    $region43: #{tpu_custom_call.1} parent=1 // pred_check_branch
      %1075 = sbr.rel (0) target = $region45
    $region44: #{tpu_custom_call.1} parent=1 // pred_region
      %s1077 = ssub.s32 128, 128
      %1078 = vsyncadd [#allocation4], %s1077
      %s1080 = sshll.u32 [#allocation10], 4
      %s1081 = int_to_ptr.vmem [resolvable:$true] %s1080
      %1083 = dma.vmem_to_hbm [thread:$0]  %s1081, 128, %s6, [#allocation4]
    $region45: #{tpu_custom_call.1} parent=1 // pred_fallthru
      _
    // Predicated region
    $region46: #{tpu_custom_call.1} parent=1 // pred_check
      _
    $region47: #{tpu_custom_call.1} parent=1 // pred_check_branch
      %1085 = sbr.rel (0) target = $region49
    $region48: #{tpu_custom_call.1} parent=1 // pred_region
      %1086 = dma.done [#allocation4], 128
    $region49: #{tpu_custom_call.1} parent=1 // pred_fallthru
      _
    %1087 = vsyncpa [#allocation3], 1
    %1088 = vsyncpa [#allocation6], 1
    %1089 = vsyncpa [#allocation9], 1
    %1090 = vsyncpa [#allocation4], 1

</llo_original>
